<compile_context>
chip_gen: v5e
topology: v5e:2x2
jax: 0.10.0
libtpu: 0.0.40
codegen_flags: <defaults>
</compile_context>

<pallas_src>
import functools
import math

import jax
import jax.numpy as jnp
from jax.experimental import pallas as pl
from jax.experimental.pallas import tpu as pltpu

N_LAYERS = 3


def _round_up(x, m):
    return pl.cdiv(x, m) * m


def _vmem_capacity_bytes():
    """Physical VMEM per TensorCore; conservative 64 MiB (v7x) fallback."""
    try:
        info = pltpu.get_tpu_info()
        for attr in ("vmem_capacity_bytes", "vmem_bytes", "vmem_size_bytes"):
            v = getattr(info, attr, None)
            if v:
                return int(v)
    except Exception:
        pass
    return 64 * 1024 * 1024


def _gen_budget():
    cap = _vmem_capacity_bytes()
    if cap >= 128 * 1024 * 1024:
        # v5e / v6e (128 MiB physical VMEM): widen the 1x-adjacency-read fused
        # regime (bf16 adj at 4096^2 = 32 MiB) and raise the scoped limit well
        # above the 16/32 MiB defaults.
        return dict(fused_max_nodes=4096, vmem_limit=100 * 1024 * 1024, tile=1024)
    # v7x (64 MiB / TC): smaller fused crossover (re-reading A 3x is cheap at
    # 3.2 TB/s and the fused kernel only occupies one of the two TCs) and a
    # ~48 MiB scoped cap so double-buffered tiles stay legal.
    # TODO(synk): a 2-row-block "parallel" variant of the fused path would use
    #   both v7x TensorCores, at the cost of re-reading layer activations.
    return dict(fused_max_nodes=2048, vmem_limit=48 * 1024 * 1024, tile=1024)


# ---------------------------------------------------------------------------
# Propagation path A: VMEM-resident fused kernel (small graphs).
# Adjacency is read from HBM exactly once for all 3 layers.
# ---------------------------------------------------------------------------
def _fused_propagate_kernel(adj_ref, ego_ref, out_ref):
    # adj_ref: (Np, Np) bf16 ; ego_ref: (Np, Dp) f32 ; out_ref: (Np, Dp) f32
    adj = adj_ref[...]
    cur = ego_ref[...]
    acc = cur                                           # layer-0 embeddings (f32)
    for _ in range(N_LAYERS):
        cur = jnp.dot(adj, cur.astype(jnp.bfloat16),
                      preferred_element_type=jnp.float32)
        acc = acc + cur
    out_ref[...] = acc * (1.0 / float(N_LAYERS + 1))    # mean over stacked layers


# ---------------------------------------------------------------------------
# Propagation path B: tiled A @ E (one layer), scales to large N.
# Grid = (row blocks [parallel], K blocks [arbitrary]).
# Outputs: cur (bf16, next-layer input) and acc (f32, running layer sum).
# The f32 output block is constant along K, so it is VMEM-resident and used
# directly as the matmul accumulator (no scratch); the running-sum update and
# the final 1/(L+1) scale live in the last-k epilogue.
# ---------------------------------------------------------------------------
def _spmm_layer_kernel(adj_ref, e_ref, accprev_ref, cur_ref, acc_ref,
                       *, tk, e_resident, scale):
    k = pl.program_id(1)

    @pl.when(k == 0)
    def _():
        acc_ref[...] = jnp.zeros_like(acc_ref)

    if e_resident:
        # e_ref is the full (Np, Dp) bf16 matrix, DMA'd once per pallas_call.
        off = pl.multiple_of(k * tk, tk)
        e_blk = e_ref[pl.ds(off, tk), :]
    else:
        # Streaming fallback for huge N: (tk, Dp) block per K step.
        e_blk = e_ref[...]

    acc_ref[...] += jnp.dot(adj_ref[...], e_blk,
                            preferred_element_type=jnp.float32)

    @pl.when(k == pl.num_programs(1) - 1)
    def _():
        s = acc_ref[...]                                  # f32 layer result
        cur_ref[...] = s.astype(cur_ref.dtype)            # bf16 -> next layer
        acc_ref[...] = (s + accprev_ref[...]) * scale     # running layer sum


def _spmm_layer(adj_bf16, e_bf16, acc_prev_f32, *, tm, tk, scale,
                e_resident, vmem_limit):
    n_pad, _ = adj_bf16.shape
    d_pad = e_bf16.shape[1]
    grid = (n_pad // tm, n_pad // tk)

    if e_resident:
        e_spec = pl.BlockSpec((n_pad, d_pad), lambda i, k: (0, 0))
    else:
        e_spec = pl.BlockSpec((tk, d_pad), lambda i, k: (k, 0))

    kernel = functools.partial(_spmm_layer_kernel, tk=tk,
                               e_resident=e_resident, scale=scale)
    cur, acc = pl.pallas_call(
        kernel,
        out_shape=(jax.ShapeDtypeStruct((n_pad, d_pad), jnp.bfloat16),
                   jax.ShapeDtypeStruct((n_pad, d_pad), jnp.float32)),
        grid_spec=pltpu.PrefetchScalarGridSpec(
            num_scalar_prefetch=0,
            grid=grid,
            in_specs=[
                pl.BlockSpec((tm, tk), lambda i, k: (i, k)),     # adjacency
                e_spec,                                          # embeddings
                pl.BlockSpec((tm, d_pad), lambda i, k: (i, 0)),  # prev acc
            ],
            out_specs=(
                pl.BlockSpec((tm, d_pad), lambda i, k: (i, 0)),  # cur (bf16)
                pl.BlockSpec((tm, d_pad), lambda i, k: (i, 0)),  # acc (f32)
            ),
        ),
        compiler_params=pltpu.CompilerParams(
            dimension_semantics=("parallel", "arbitrary"),
            vmem_limit_bytes=vmem_limit,
        ),
    )(adj_bf16, e_bf16, acc_prev_f32)
    return cur, acc


# ---------------------------------------------------------------------------
# computer(): 3 propagation layers + layer mean.
# ---------------------------------------------------------------------------
def lightgcn_computer(norm_adj, ego_embeddings, *, force_tiled=False,
                      tm=None, tk=None, e_resident=None):
    n, d = ego_embeddings.shape
    d_pad = _round_up(d, 128)                 # lane-dense E/acc/out tiles
    budget = _gen_budget()
    vmem_limit = budget["vmem_limit"]

    n_pad128 = _round_up(n, 128)
    use_fused = (not force_tiled) and (n_pad128 <= budget["fused_max_nodes"])

    def _pad(adj_np, ego_np, n_pad):
        adj_p = jnp.pad(adj_np.astype(jnp.bfloat16),
                        ((0, n_pad - n), (0, n_pad - n)))
        ego_p = jnp.pad(ego_np.astype(jnp.float32),
                        ((0, n_pad - n), (0, d_pad - d)))
        return adj_p, ego_p

    if use_fused:
        n_pad = n_pad128
        adj, ego = _pad(norm_adj, ego_embeddings, n_pad)
        out = pl.pallas_call(
            _fused_propagate_kernel,
            out_shape=jax.ShapeDtypeStruct((n_pad, d_pad), jnp.float32),
            in_specs=[
                pl.BlockSpec((n_pad, n_pad), lambda: (0, 0)),
                pl.BlockSpec((n_pad, d_pad), lambda: (0, 0)),
            ],
            out_specs=pl.BlockSpec((n_pad, d_pad), lambda: (0, 0)),
            compiler_params=pltpu.CompilerParams(
                vmem_limit_bytes=vmem_limit),
        )(adj, ego)
    else:
        tile = budget["tile"]
        tm = int(tm) if tm is not None else tile
        tk = int(tk) if tk is not None else tile
        # Cap tiles at the (128-rounded) node count, then pad N to the tile so
        # big tiles are never silently degraded.
        tm = min(tm, n_pad128)
        tk = min(tk, n_pad128)
        n_pad = _round_up(n, math.lcm(tm, tk))
        adj, ego = _pad(norm_adj, ego_embeddings, n_pad)

        if e_resident is None:
            e_resident = (n_pad * d_pad * 2) <= (vmem_limit // 4)

        acc = ego                                   # running layer sum (f32)
        cur = ego.astype(jnp.bfloat16)              # current layer input (bf16)
        for layer in range(N_LAYERS):
            scale = (1.0 / float(N_LAYERS + 1)) if layer == N_LAYERS - 1 else 1.0
            cur, acc = _spmm_layer(adj, cur, acc, tm=tm, tk=tk, scale=scale,
                                   e_resident=e_resident, vmem_limit=vmem_limit)
        out = acc

    return out[:n, :d]


# ---------------------------------------------------------------------------
# Pairwise scoring: sigmoid(sum(u * i, dim=-1)) with a lane-dense (1, B) output.
# Inputs are transposed to (D, B) so the reduction is over sublanes and the
# stores are full 128-lane vregs (no masked partial stores).
# ---------------------------------------------------------------------------
def _score_kernel(u_ref, i_ref, out_ref):
    # u_ref, i_ref: (D, TB) f32 ; out_ref: (1, TB) f32
    s = jnp.sum(u_ref[...] * i_ref[...], axis=0, keepdims=True)
    out_ref[...] = jax.nn.sigmoid(s)


def lightgcn_score(users_emb, items_emb, *, tb=512):
    b, d = users_emb.shape
    tb = min(tb, _round_up(b, 128))           # wide lane-dense tiles, capped at B
    b_pad = _round_up(b, tb)
    ut = jnp.pad(users_emb.astype(jnp.float32).T, ((0, 0), (0, b_pad - b)))
    it = jnp.pad(items_emb.astype(jnp.float32).T, ((0, 0), (0, b_pad - b)))
    out = pl.pallas_call(
        _score_kernel,
        out_shape=jax.ShapeDtypeStruct((1, b_pad), jnp.float32),
        grid=(b_pad // tb,),
        in_specs=[
            pl.BlockSpec((d, tb), lambda j: (0, j)),
            pl.BlockSpec((d, tb), lambda j: (0, j)),
        ],
        out_specs=pl.BlockSpec((1, tb), lambda j: (0, j)),
        compiler_params=pltpu.CompilerParams(
            dimension_semantics=("parallel",)),
    )(ut, it)
    return out[0, :b]


# ---------------------------------------------------------------------------
# Full forward (glue in plain JAX: concat, gather, split)
# ---------------------------------------------------------------------------
def lightgcn_forward(user_weight, item_weight, norm_adj, user_ids, item_ids,
                     **computer_kwargs):
    user_num = user_weight.shape[0]
    ego = jnp.concatenate([user_weight.astype(jnp.float32),
                           item_weight.astype(jnp.float32)], axis=0)
    all_emb = lightgcn_computer(norm_adj, ego, **computer_kwargs)
    all_users = all_emb[:user_num]
    all_items = all_emb[user_num:]
    # TODO(synk): for large scoring batches, fuse this gather into the scoring
    # kernel with PrefetchScalarGridSpec(num_scalar_prefetch=2) + pl.Element
    # row index maps so the gather DMA overlaps the dot/sigmoid.
    users_emb = jnp.take(all_users, user_ids, axis=0)
    items_emb = jnp.take(all_items, item_ids, axis=0)
    return lightgcn_score(users_emb, items_emb)


# ---------------------------------------------------------------------------
# Pure-JAX reference (sanity check)
# ---------------------------------------------------------------------------
def lightgcn_forward_ref(user_weight, item_weight, norm_adj, user_ids, item_ids):
    user_num = user_weight.shape[0]
    ego = jnp.concatenate([user_weight, item_weight], axis=0)
    embs = [ego]
    cur = ego
    for _ in range(N_LAYERS):
        cur = norm_adj @ cur
        embs.append(cur)
    all_emb = jnp.mean(jnp.stack(embs, axis=1), axis=1)
    u = all_emb[:user_num][user_ids]
    i = all_emb[user_num:][item_ids]
    return jax.nn.sigmoid(jnp.sum(u * i, axis=1))


if __name__ == "__main__":
    # Synthetic sizes (deterministic). n_nodes = 320 -> padded to 384 in the
    # forced-tiled path with 128x128 tiles, exercising a (3, 3) grid.
    user_num, item_num, embed_dim, batch = 112, 208, 32, 8
    n_nodes = user_num + item_num

    key = jax.random.PRNGKey(0)
    k_u, k_i, k_r, k_uid, k_iid = jax.random.split(key, 5)

    # Embedding tables: normal(std=0.01), as in the module's __init__.
    user_weight = 0.01 * jax.random.normal(k_u, (user_num, embed_dim), jnp.float32)
    item_weight = 0.01 * jax.random.normal(k_i, (item_num, embed_dim), jnp.float32)

    # Synthetic normalized bipartite adjacency D^{-1/2} A D^{-1/2} (dense).
    R = (jax.random.uniform(k_r, (user_num, item_num)) < 0.1).astype(jnp.float32)
    A = jnp.zeros((n_nodes, n_nodes), jnp.float32)
    A = A.at[:user_num, user_num:].set(R)
    A = A.at[user_num:, :user_num].set(R.T)
    deg = A.sum(axis=1)
    d_inv_sqrt = jnp.where(deg > 0, 1.0 / jnp.sqrt(jnp.maximum(deg, 1e-12)), 0.0)
    norm_adj = d_inv_sqrt[:, None] * A * d_inv_sqrt[None, :]

    # data = (user_ids, item_ids)
    user_ids = jax.random.randint(k_uid, (batch,), 0, user_num)
    item_ids = jax.random.randint(k_iid, (batch,), 0, item_num)

    ref = lightgcn_forward_ref(user_weight, item_weight, norm_adj,
                               user_ids, item_ids)

    # Path A: VMEM-resident fused propagation (default for small N).
    out_fused = lightgcn_forward(user_weight, item_weight, norm_adj,
                                 user_ids, item_ids)
    out_fused = jax.block_until_ready(out_fused)

    # Path B: tiled propagation, VMEM-resident E (grid (3,3) at these sizes).
    out_tiled = lightgcn_forward(user_weight, item_weight, norm_adj,
                                 user_ids, item_ids,
                                 force_tiled=True, tm=128, tk=128)
    out_tiled = jax.block_until_ready(out_tiled)

    # Path B': tiled propagation with the streaming-E fallback (huge-N path).
    out_stream = lightgcn_forward(user_weight, item_weight, norm_adj,
                                  user_ids, item_ids,
                                  force_tiled=True, tm=128, tk=128,
                                  e_resident=False)
    out_stream = jax.block_until_ready(out_stream)

    assert out_fused.shape == (batch,)
    assert out_tiled.shape == (batch,)
    assert out_stream.shape == (batch,)
    # bf16 adjacency/activations loosen the tolerance vs the pure-f32 reference.
    assert jnp.allclose(out_fused, ref, atol=1e-3, rtol=1e-3), (out_fused, ref)
    assert jnp.allclose(out_tiled, ref, atol=1e-3, rtol=1e-3), (out_tiled, ref)
    assert jnp.allclose(out_stream, ref, atol=1e-3, rtol=1e-3), (out_stream, ref)

    print("KERNEL_OK")
</pallas_src>

<mosaic_0001>
module attributes {stable_mosaic.version = 11 : i64} {
  func.func @_fused_propagate_kernel(%arg0: memref<384x384xbf16, #tpu.memory_space<vmem>>, %arg1: memref<384x128xf32, #tpu.memory_space<vmem>>, %arg2: memref<384x128xf32, #tpu.memory_space<vmem>>) attributes {dimension_semantics = [], scalar_prefetch = 0 : i64, scratch_operands = 0 : i64, tpu.core_type = #tpu.core_type<tc>} {
    %c0 = arith.constant 0 : index
    %c0_0 = arith.constant 0 : index
    %0 = vector.load %arg0[%c0, %c0_0] : memref<384x384xbf16, #tpu.memory_space<vmem>>, vector<384x384xbf16>
    %c0_1 = arith.constant 0 : index
    %c0_2 = arith.constant 0 : index
    %1 = vector.load %arg1[%c0_1, %c0_2] : memref<384x128xf32, #tpu.memory_space<vmem>>, vector<384x128xf32>
    %2 = arith.truncf %1 : vector<384x128xf32> to vector<384x128xbf16>
    %cst = arith.constant dense<0.000000e+00> : vector<384x128xf32>
    %3 = tpu.matmul %0, %2, %cst {dimension_numbers = #tpu.dot_dimension_numbers<[1], [0], [0], [1], [0, 0, 1, 1], [], []>} : vector<384x384xbf16>, vector<384x128xbf16>, vector<384x128xf32> -> vector<384x128xf32>
    %4 = arith.addf %1, %3 : vector<384x128xf32>
    %5 = arith.truncf %3 : vector<384x128xf32> to vector<384x128xbf16>
    %cst_3 = arith.constant dense<0.000000e+00> : vector<384x128xf32>
    %6 = tpu.matmul %0, %5, %cst_3 {dimension_numbers = #tpu.dot_dimension_numbers<[1], [0], [0], [1], [0, 0, 1, 1], [], []>} : vector<384x384xbf16>, vector<384x128xbf16>, vector<384x128xf32> -> vector<384x128xf32>
    %7 = arith.addf %4, %6 : vector<384x128xf32>
    %8 = arith.truncf %6 : vector<384x128xf32> to vector<384x128xbf16>
    %cst_4 = arith.constant dense<0.000000e+00> : vector<384x128xf32>
    %9 = tpu.matmul %0, %8, %cst_4 {dimension_numbers = #tpu.dot_dimension_numbers<[1], [0], [0], [1], [0, 0, 1, 1], [], []>} : vector<384x384xbf16>, vector<384x128xbf16>, vector<384x128xf32> -> vector<384x128xf32>
    %10 = arith.addf %7, %9 : vector<384x128xf32>
    %cst_5 = arith.constant 2.500000e-01 : f32
    %11 = vector.broadcast %cst_5 : f32 to vector<384x128xf32>
    %12 = arith.mulf %10, %11 : vector<384x128xf32>
    %c0_6 = arith.constant 0 : index
    %c0_7 = arith.constant 0 : index
    %13 = vector.load %arg2[%c0_6, %c0_7] : memref<384x128xf32, #tpu.memory_space<vmem>>, vector<384x128xf32>
    tpu.vector_store %arg2[%c0_6, %c0_7], %12 {strides = array<i32>} : memref<384x128xf32, #tpu.memory_space<vmem>>, vector<384x128xf32>,
    return
  }
}

</mosaic_0001>

<llo_original>
// kernel: tpu_custom_call.1
$region0: #{tpu_custom_call.1}
  #allocation0 [shape = 'u32[]', space=smem, size = 0x4, offset = 0x4, fixed_abs, tag = 'smem constant byte address 0x4 - core index']
  #allocation1 [shape = 'u32[72,128]{1,0:T(1,128)}', space=vmem, size = 0x9000, scoped, tag = 'internal scratch']
  %s0 = inlined_call_operand.hbm [shape: bf16[384,384], index: 0, kind: input, shape index: {}]
  %s1 = inlined_call_operand.hbm [shape: f32[384,128], index: 1, kind: input, shape index: {}]
  %s2 = inlined_call_operand.hbm [shape: f32[384,128], index: 2, kind: output, shape index: {}]
  %s3 = sld [smem:[#allocation0]]
  $region26: #{tpu_custom_call.1} parent=0
    _
  %s5 = ssub.s32 1, %s3
  %s6 = scalar_select 0, %s5, %s3
  $region1: #{tpu_custom_call.1} parent=0
    #allocation2 [shape = 'u8[294912]{0}', space=vmem, size = 0x48000, scoped, tag = 'input window, operand 0, single buffered']
    #allocation3 [shape = 's32[1]{0}', space=sflag, size = 0x4, scoped, tag = 'scoped memory for tpu_custom_call.1']
    #allocation4 [shape = 's32[1]{0}', space=sflag, size = 0x4, scoped, tag = 'scoped memory for tpu_custom_call.1']
    #allocation5 [shape = 'u8[196608]{0}', space=vmem, size = 0x30000, scoped, tag = 'input window, operand 1, single buffered']
    #allocation6 [shape = 's32[1]{0}', space=sflag, size = 0x4, scoped, tag = 'scoped memory for tpu_custom_call.1']
    #allocation7 [shape = 'u8[196608]{0}', space=vmem, size = 0x30000, scoped, tag = 'output window, operand 0, single buffered']
    %7 = vsyncpa [#allocation3], 0
    %8 = vsyncpa [#allocation6], 0
    %9 = vsyncpa [#allocation4], 0
    // Predicated region
    $region2: #{tpu_custom_call.1} parent=1 // pred_check
      _
    $region3: #{tpu_custom_call.1} parent=1 // pred_check_branch
      %11 = sbr.rel (0) target = $region5
    $region4: #{tpu_custom_call.1} parent=1 // pred_region
      %13 = vsyncadd [#allocation3], 0
      %s14 = sshll.u32 %s0, 4
      %s15 = int_to_ptr.hbm [resolvable:$true] %s14
      %s16 = sshll.u32 [#allocation2], 4
      %s17 = int_to_ptr.vmem [resolvable:$true] %s16
      %22 = dma.hbm_to_vmem [thread:$0]  %s15, 9216, %s17, [#allocation3], 192, 192, 12
    $region5: #{tpu_custom_call.1} parent=1 // pred_fallthru
      _
    // Predicated region
    $region6: #{tpu_custom_call.1} parent=1 // pred_check
      _
    $region7: #{tpu_custom_call.1} parent=1 // pred_check_branch
      %24 = sbr.rel (0) target = $region9
    $region8: #{tpu_custom_call.1} parent=1 // pred_region
      %26 = vsyncadd [#allocation6], 0
      %s27 = sshll.u32 %s1, 4
      %s28 = int_to_ptr.hbm [resolvable:$true] %s27
      %s29 = sshll.u32 [#allocation5], 4
      %s30 = int_to_ptr.vmem [resolvable:$true] %s29
      %35 = dma.hbm_to_vmem [thread:$0]  %s28, 6144, %s30, [#allocation6], 128, 128, 8
    $region9: #{tpu_custom_call.1} parent=1 // pred_fallthru
      _
    // Predicated region
    $region10: #{tpu_custom_call.1} parent=1 // pred_check
      _
    $region11: #{tpu_custom_call.1} parent=1 // pred_check_branch
      %37 = sbr.rel (0) target = $region13
    $region12: #{tpu_custom_call.1} parent=1 // pred_region
      %39 = dma.done [#allocation3], 9216
    $region13: #{tpu_custom_call.1} parent=1 // pred_fallthru
      _
    // Predicated region
    $region14: #{tpu_custom_call.1} parent=1 // pred_check
      _
    $region15: #{tpu_custom_call.1} parent=1 // pred_check_branch
      %41 = sbr.rel (0) target = $region17
    $region16: #{tpu_custom_call.1} parent=1 // pred_region
      %43 = dma.done [#allocation6], 6144
    $region17: #{tpu_custom_call.1} parent=1 // pred_fallthru
      _
    %v44 = vld [vmem:[#allocation2] sm:$0xff]
    %v45 = vld [vmem:[#allocation2 + $0x8] sm:$0xf]
    %v46 = vld [vmem:[#allocation2 + $0xc] sm:$0xff]
    %v47 = vld [vmem:[#allocation2 + $0x14] sm:$0xf]
    %v48 = vld [vmem:[#allocation2 + $0x18] sm:$0xff]
    %v49 = vld [vmem:[#allocation2 + $0x20] sm:$0xf]
    %v50 = vld [vmem:[#allocation2 + $0x24] sm:$0xff]
    %v51 = vld [vmem:[#allocation2 + $0x2c] sm:$0xf]
    %v52 = vld [vmem:[#allocation2 + $0x30] sm:$0xff]
    %v53 = vld [vmem:[#allocation2 + $0x38] sm:$0xf]
    %v54 = vld [vmem:[#allocation2 + $0x3c] sm:$0xff]
    %v55 = vld [vmem:[#allocation2 + $0x44] sm:$0xf]
    %v56 = vld [vmem:[#allocation2 + $0x48] sm:$0xff]
    %v57 = vld [vmem:[#allocation2 + $0x50] sm:$0xf]
    %v58 = vld [vmem:[#allocation2 + $0x54] sm:$0xff]
    %v59 = vld [vmem:[#allocation2 + $0x5c] sm:$0xf]
    %v60 = vld [vmem:[#allocation2 + $0x60] sm:$0xff]
    %v61 = vld [vmem:[#allocation2 + $0x68] sm:$0xf]
    %v62 = vld [vmem:[#allocation2 + $0x6c] sm:$0xff]
    %v63 = vld [vmem:[#allocation2 + $0x74] sm:$0xf]
    %v64 = vld [vmem:[#allocation2 + $0x78] sm:$0xff]
    %v65 = vld [vmem:[#allocation2 + $0x80] sm:$0xf]
    %v66 = vld [vmem:[#allocation2 + $0x84] sm:$0xff]
    %v67 = vld [vmem:[#allocation2 + $0x8c] sm:$0xf]
    %v68 = vld [vmem:[#allocation2 + $0x90] sm:$0xff]
    %v69 = vld [vmem:[#allocation2 + $0x98] sm:$0xf]
    %v70 = vld [vmem:[#allocation2 + $0x9c] sm:$0xff]
    %v71 = vld [vmem:[#allocation2 + $0xa4] sm:$0xf]
    %v72 = vld [vmem:[#allocation2 + $0xa8] sm:$0xff]
    %v73 = vld [vmem:[#allocation2 + $0xb0] sm:$0xf]
    %v74 = vld [vmem:[#allocation2 + $0xb4] sm:$0xff]
    %v75 = vld [vmem:[#allocation2 + $0xbc] sm:$0xf]
    %v76 = vld [vmem:[#allocation2 + $0xc0] sm:$0xff]
    %v77 = vld [vmem:[#allocation2 + $0xc8] sm:$0xf]
    %v78 = vld [vmem:[#allocation2 + $0xcc] sm:$0xff]
    %v79 = vld [vmem:[#allocation2 + $0xd4] sm:$0xf]
    %v80 = vld [vmem:[#allocation2 + $0xd8] sm:$0xff]
    %v81 = vld [vmem:[#allocation2 + $0xe0] sm:$0xf]
    %v82 = vld [vmem:[#allocation2 + $0xe4] sm:$0xff]
    %v83 = vld [vmem:[#allocation2 + $0xec] sm:$0xf]
    %v84 = vld [vmem:[#allocation2 + $0xf0] sm:$0xff]
    %v85 = vld [vmem:[#allocation2 + $0xf8] sm:$0xf]
    %v86 = vld [vmem:[#allocation2 + $0xfc] sm:$0xff]
    %v87 = vld [vmem:[#allocation2 + $0x104] sm:$0xf]
    %v88 = vld [vmem:[#allocation2 + $0x108] sm:$0xff]
    %v89 = vld [vmem:[#allocation2 + $0x110] sm:$0xf]
    %v90 = vld [vmem:[#allocation2 + $0x114] sm:$0xff]
    %v91 = vld [vmem:[#allocation2 + $0x11c] sm:$0xf]
    %v92 = vld [vmem:[#allocation2 + $0x120] sm:$0xff]
    %v93 = vld [vmem:[#allocation2 + $0x128] sm:$0xf]
    %v94 = vld [vmem:[#allocation2 + $0x12c] sm:$0xff]
    %v95 = vld [vmem:[#allocation2 + $0x134] sm:$0xf]
    %v96 = vld [vmem:[#allocation2 + $0x138] sm:$0xff]
    %v97 = vld [vmem:[#allocation2 + $0x140] sm:$0xf]
    %v98 = vld [vmem:[#allocation2 + $0x144] sm:$0xff]
    %v99 = vld [vmem:[#allocation2 + $0x14c] sm:$0xf]
    %v100 = vld [vmem:[#allocation2 + $0x150] sm:$0xff]
    %v101 = vld [vmem:[#allocation2 + $0x158] sm:$0xf]
    %v102 = vld [vmem:[#allocation2 + $0x15c] sm:$0xff]
    %v103 = vld [vmem:[#allocation2 + $0x164] sm:$0xf]
    %v104 = vld [vmem:[#allocation2 + $0x168] sm:$0xff]
    %v105 = vld [vmem:[#allocation2 + $0x170] sm:$0xf]
    %v106 = vld [vmem:[#allocation2 + $0x174] sm:$0xff]
    %v107 = vld [vmem:[#allocation2 + $0x17c] sm:$0xf]
    %v108 = vld [vmem:[#allocation2 + $0x180] sm:$0xff]
    %v109 = vld [vmem:[#allocation2 + $0x188] sm:$0xf]
    %v110 = vld [vmem:[#allocation2 + $0x18c] sm:$0xff]
    %v111 = vld [vmem:[#allocation2 + $0x194] sm:$0xf]
    %v112 = vld [vmem:[#allocation2 + $0x198] sm:$0xff]
    %v113 = vld [vmem:[#allocation2 + $0x1a0] sm:$0xf]
    %v114 = vld [vmem:[#allocation2 + $0x1a4] sm:$0xff]
    %v115 = vld [vmem:[#allocation2 + $0x1ac] sm:$0xf]
    %v116 = vld [vmem:[#allocation2 + $0x1b0] sm:$0xff]
    %v117 = vld [vmem:[#allocation2 + $0x1b8] sm:$0xf]
    %v118 = vld [vmem:[#allocation2 + $0x1bc] sm:$0xff]
    %v119 = vld [vmem:[#allocation2 + $0x1c4] sm:$0xf]
    %v120 = vld [vmem:[#allocation2 + $0x1c8] sm:$0xff]
    %v121 = vld [vmem:[#allocation2 + $0x1d0] sm:$0xf]
    %v122 = vld [vmem:[#allocation2 + $0x1d4] sm:$0xff]
    %v123 = vld [vmem:[#allocation2 + $0x1dc] sm:$0xf]
    %v124 = vld [vmem:[#allocation2 + $0x1e0] sm:$0xff]
    %v125 = vld [vmem:[#allocation2 + $0x1e8] sm:$0xf]
    %v126 = vld [vmem:[#allocation2 + $0x1ec] sm:$0xff]
    %v127 = vld [vmem:[#allocation2 + $0x1f4] sm:$0xf]
    %v128 = vld [vmem:[#allocation2 + $0x1f8] sm:$0xff]
    %v129 = vld [vmem:[#allocation2 + $0x200] sm:$0xf]
    %v130 = vld [vmem:[#allocation2 + $0x204] sm:$0xff]
    %v131 = vld [vmem:[#allocation2 + $0x20c] sm:$0xf]
    %v132 = vld [vmem:[#allocation2 + $0x210] sm:$0xff]
    %v133 = vld [vmem:[#allocation2 + $0x218] sm:$0xf]
    %v134 = vld [vmem:[#allocation2 + $0x21c] sm:$0xff]
    %v135 = vld [vmem:[#allocation2 + $0x224] sm:$0xf]
    %v136 = vld [vmem:[#allocation2 + $0x228] sm:$0xff]
    %v137 = vld [vmem:[#allocation2 + $0x230] sm:$0xf]
    %v138 = vld [vmem:[#allocation2 + $0x234] sm:$0xff]
    %v139 = vld [vmem:[#allocation2 + $0x23c] sm:$0xf]
    %v140 = vld [vmem:[#allocation5] sm:$0xff]
    %v141 = vld [vmem:[#allocation5 + $0x8] sm:$0xff]
    %v142 = vld [vmem:[#allocation5 + $0x10] sm:$0xff]
    %v143 = vld [vmem:[#allocation5 + $0x18] sm:$0xff]
    %v144 = vld [vmem:[#allocation5 + $0x20] sm:$0xff]
    %v145 = vld [vmem:[#allocation5 + $0x28] sm:$0xff]
    %v146 = vld [vmem:[#allocation5 + $0x30] sm:$0xff]
    %v147 = vld [vmem:[#allocation5 + $0x38] sm:$0xff]
    %v148 = vld [vmem:[#allocation5 + $0x40] sm:$0xff]
    %v149 = vld [vmem:[#allocation5 + $0x48] sm:$0xff]
    %v150 = vld [vmem:[#allocation5 + $0x50] sm:$0xff]
    %v151 = vld [vmem:[#allocation5 + $0x58] sm:$0xff]
    %v152 = vld [vmem:[#allocation5 + $0x60] sm:$0xff]
    %v153 = vld [vmem:[#allocation5 + $0x68] sm:$0xff]
    %v154 = vld [vmem:[#allocation5 + $0x70] sm:$0xff]
    %v155 = vld [vmem:[#allocation5 + $0x78] sm:$0xff]
    %v156 = vld [vmem:[#allocation5 + $0x80] sm:$0xff]
    %v157 = vld [vmem:[#allocation5 + $0x88] sm:$0xff]
    %v158 = vld [vmem:[#allocation5 + $0x90] sm:$0xff]
    %v159 = vld [vmem:[#allocation5 + $0x98] sm:$0xff]
    %v160 = vld [vmem:[#allocation5 + $0xa0] sm:$0xff]
    %v161 = vld [vmem:[#allocation5 + $0xa8] sm:$0xff]
    %v162 = vld [vmem:[#allocation5 + $0xb0] sm:$0xff]
    %v163 = vld [vmem:[#allocation5 + $0xb8] sm:$0xff]
    %v164 = vld [vmem:[#allocation5 + $0xc0] sm:$0xff]
    %v165 = vld [vmem:[#allocation5 + $0xc8] sm:$0xff]
    %v166 = vld [vmem:[#allocation5 + $0xd0] sm:$0xff]
    %v167 = vld [vmem:[#allocation5 + $0xd8] sm:$0xff]
    %v168 = vld [vmem:[#allocation5 + $0xe0] sm:$0xff]
    %v169 = vld [vmem:[#allocation5 + $0xe8] sm:$0xff]
    %v170 = vld [vmem:[#allocation5 + $0xf0] sm:$0xff]
    %v171 = vld [vmem:[#allocation5 + $0xf8] sm:$0xff]
    %v172 = vld [vmem:[#allocation5 + $0x100] sm:$0xff]
    %v173 = vld [vmem:[#allocation5 + $0x108] sm:$0xff]
    %v174 = vld [vmem:[#allocation5 + $0x110] sm:$0xff]
    %v175 = vld [vmem:[#allocation5 + $0x118] sm:$0xff]
    %v176 = vld [vmem:[#allocation5 + $0x120] sm:$0xff]
    %v177 = vld [vmem:[#allocation5 + $0x128] sm:$0xff]
    %v178 = vld [vmem:[#allocation5 + $0x130] sm:$0xff]
    %v179 = vld [vmem:[#allocation5 + $0x138] sm:$0xff]
    %v180 = vld [vmem:[#allocation5 + $0x140] sm:$0xff]
    %v181 = vld [vmem:[#allocation5 + $0x148] sm:$0xff]
    %v182 = vld [vmem:[#allocation5 + $0x150] sm:$0xff]
    %v183 = vld [vmem:[#allocation5 + $0x158] sm:$0xff]
    %v184 = vld [vmem:[#allocation5 + $0x160] sm:$0xff]
    %v185 = vld [vmem:[#allocation5 + $0x168] sm:$0xff]
    %v186 = vld [vmem:[#allocation5 + $0x170] sm:$0xff]
    %v187 = vld [vmem:[#allocation5 + $0x178] sm:$0xff]
    %v188 = vpack.c.bf16 %v141, %v140
    %v189 = vpack.c.bf16 %v143, %v142
    %v190 = vpack.c.bf16 %v145, %v144
    %v191 = vpack.c.bf16 %v147, %v146
    %v192 = vpack.c.bf16 %v149, %v148
    %v193 = vpack.c.bf16 %v151, %v150
    %v194 = vpack.c.bf16 %v153, %v152
    %v195 = vpack.c.bf16 %v155, %v154
    %v196 = vpack.c.bf16 %v157, %v156
    %v197 = vpack.c.bf16 %v159, %v158
    %v198 = vpack.c.bf16 %v161, %v160
    %v199 = vpack.c.bf16 %v163, %v162
    %v200 = vpack.c.bf16 %v165, %v164
    %v201 = vpack.c.bf16 %v167, %v166
    %v202 = vpack.c.bf16 %v169, %v168
    %v203 = vpack.c.bf16 %v171, %v170
    %v204 = vpack.c.bf16 %v173, %v172
    %v205 = vpack.c.bf16 %v175, %v174
    %v206 = vpack.c.bf16 %v177, %v176
    %v207 = vpack.c.bf16 %v179, %v178
    %v208 = vpack.c.bf16 %v181, %v180
    %v209 = vpack.c.bf16 %v183, %v182
    %v210 = vpack.c.bf16 %v185, %v184
    %v211 = vpack.c.bf16 %v187, %v186
    %v308 = vunpack.c.l.b16 %v44
    %v309 = vunpack.c.h.b16 %v44
    %v310 = vunpack.c.l.b16 %v45
    %v311 = vunpack.c.l.b16 %v46
    %v312 = vunpack.c.h.b16 %v46
    %v313 = vunpack.c.l.b16 %v47
    %v314 = vunpack.c.l.b16 %v48
    %v315 = vunpack.c.h.b16 %v48
    %v316 = vunpack.c.l.b16 %v49
    %v317 = vunpack.c.l.b16 %v50
    %v318 = vunpack.c.h.b16 %v50
    %v319 = vunpack.c.l.b16 %v51
    %v320 = vunpack.c.l.b16 %v52
    %v321 = vunpack.c.h.b16 %v52
    %v322 = vunpack.c.l.b16 %v53
    %v323 = vunpack.c.l.b16 %v54
    %v324 = vunpack.c.h.b16 %v54
    %v325 = vunpack.c.l.b16 %v55
    %v326 = vunpack.c.l.b16 %v56
    %v327 = vunpack.c.h.b16 %v56
    %v328 = vunpack.c.l.b16 %v57
    %v329 = vunpack.c.l.b16 %v58
    %v330 = vunpack.c.h.b16 %v58
    %v331 = vunpack.c.l.b16 %v59
    %v332 = vunpack.c.l.b16 %v60
    %v333 = vunpack.c.h.b16 %v60
    %v334 = vunpack.c.l.b16 %v61
    %v335 = vunpack.c.l.b16 %v62
    %v336 = vunpack.c.h.b16 %v62
    %v337 = vunpack.c.l.b16 %v63
    %v338 = vunpack.c.l.b16 %v64
    %v339 = vunpack.c.h.b16 %v64
    %v340 = vunpack.c.l.b16 %v65
    %v341 = vunpack.c.l.b16 %v66
    %v342 = vunpack.c.h.b16 %v66
    %v343 = vunpack.c.l.b16 %v67
    %v344 = vunpack.c.l.b16 %v68
    %v345 = vunpack.c.h.b16 %v68
    %v346 = vunpack.c.l.b16 %v69
    %v347 = vunpack.c.l.b16 %v70
    %v348 = vunpack.c.h.b16 %v70
    %v349 = vunpack.c.l.b16 %v71
    %v350 = vunpack.c.l.b16 %v72
    %v351 = vunpack.c.h.b16 %v72
    %v352 = vunpack.c.l.b16 %v73
    %v353 = vunpack.c.l.b16 %v74
    %v354 = vunpack.c.h.b16 %v74
    %v355 = vunpack.c.l.b16 %v75
    %v356 = vunpack.c.l.b16 %v76
    %v357 = vunpack.c.h.b16 %v76
    %v358 = vunpack.c.l.b16 %v77
    %v359 = vunpack.c.l.b16 %v78
    %v360 = vunpack.c.h.b16 %v78
    %v361 = vunpack.c.l.b16 %v79
    %v362 = vunpack.c.l.b16 %v80
    %v363 = vunpack.c.h.b16 %v80
    %v364 = vunpack.c.l.b16 %v81
    %v365 = vunpack.c.l.b16 %v82
    %v366 = vunpack.c.h.b16 %v82
    %v367 = vunpack.c.l.b16 %v83
    %v368 = vunpack.c.l.b16 %v84
    %v369 = vunpack.c.h.b16 %v84
    %v370 = vunpack.c.l.b16 %v85
    %v371 = vunpack.c.l.b16 %v86
    %v372 = vunpack.c.h.b16 %v86
    %v373 = vunpack.c.l.b16 %v87
    %v374 = vunpack.c.l.b16 %v88
    %v375 = vunpack.c.h.b16 %v88
    %v376 = vunpack.c.l.b16 %v89
    %v377 = vunpack.c.l.b16 %v90
    %v378 = vunpack.c.h.b16 %v90
    %v379 = vunpack.c.l.b16 %v91
    %v380 = vunpack.c.l.b16 %v92
    %v381 = vunpack.c.h.b16 %v92
    %v382 = vunpack.c.l.b16 %v93
    %v383 = vunpack.c.l.b16 %v94
    %v384 = vunpack.c.h.b16 %v94
    %v385 = vunpack.c.l.b16 %v95
    %v386 = vunpack.c.l.b16 %v96
    %v387 = vunpack.c.h.b16 %v96
    %v388 = vunpack.c.l.b16 %v97
    %v389 = vunpack.c.l.b16 %v98
    %v390 = vunpack.c.h.b16 %v98
    %v391 = vunpack.c.l.b16 %v99
    %v392 = vunpack.c.l.b16 %v100
    %v393 = vunpack.c.h.b16 %v100
    %v394 = vunpack.c.l.b16 %v101
    %v395 = vunpack.c.l.b16 %v102
    %v396 = vunpack.c.h.b16 %v102
    %v397 = vunpack.c.l.b16 %v103
    %v398 = vunpack.c.l.b16 %v104
    %v399 = vunpack.c.h.b16 %v104
    %v400 = vunpack.c.l.b16 %v105
    %v401 = vunpack.c.l.b16 %v106
    %v402 = vunpack.c.h.b16 %v106
    %v403 = vunpack.c.l.b16 %v107
    %v404 = vunpack.c.l.b16 %v108
    %v405 = vunpack.c.h.b16 %v108
    %v406 = vunpack.c.l.b16 %v109
    %v407 = vunpack.c.l.b16 %v110
    %v408 = vunpack.c.h.b16 %v110
    %v409 = vunpack.c.l.b16 %v111
    %v410 = vunpack.c.l.b16 %v112
    %v411 = vunpack.c.h.b16 %v112
    %v412 = vunpack.c.l.b16 %v113
    %v413 = vunpack.c.l.b16 %v114
    %v414 = vunpack.c.h.b16 %v114
    %v415 = vunpack.c.l.b16 %v115
    %v416 = vunpack.c.l.b16 %v116
    %v417 = vunpack.c.h.b16 %v116
    %v418 = vunpack.c.l.b16 %v117
    %v419 = vunpack.c.l.b16 %v118
    %v420 = vunpack.c.h.b16 %v118
    %v421 = vunpack.c.l.b16 %v119
    %v422 = vunpack.c.l.b16 %v120
    %v423 = vunpack.c.h.b16 %v120
    %v424 = vunpack.c.l.b16 %v121
    %v425 = vunpack.c.l.b16 %v122
    %v426 = vunpack.c.h.b16 %v122
    %v427 = vunpack.c.l.b16 %v123
    %v428 = vunpack.c.l.b16 %v124
    %v429 = vunpack.c.h.b16 %v124
    %v430 = vunpack.c.l.b16 %v125
    %v431 = vunpack.c.l.b16 %v126
    %v432 = vunpack.c.h.b16 %v126
    %v433 = vunpack.c.l.b16 %v127
    %v434 = vunpack.c.l.b16 %v128
    %v435 = vunpack.c.h.b16 %v128
    %v436 = vunpack.c.l.b16 %v129
    %v437 = vunpack.c.l.b16 %v130
    %v438 = vunpack.c.h.b16 %v130
    %v439 = vunpack.c.l.b16 %v131
    %v440 = vunpack.c.l.b16 %v132
    %v441 = vunpack.c.h.b16 %v132
    %v442 = vunpack.c.l.b16 %v133
    %v443 = vunpack.c.l.b16 %v134
    %v444 = vunpack.c.h.b16 %v134
    %v445 = vunpack.c.l.b16 %v135
    %v446 = vunpack.c.l.b16 %v136
    %v447 = vunpack.c.h.b16 %v136
    %v448 = vunpack.c.l.b16 %v137
    %v449 = vunpack.c.l.b16 %v138
    %v450 = vunpack.c.h.b16 %v138
    %v451 = vunpack.c.l.b16 %v139
    %v452 = vpack.c.b16 %v311, %v308
    %v453 = vpack.c.b16 %v312, %v309
    %v454 = vpack.c.b16 %v313, %v310
    %v455 = vpack.c.b16 %v317, %v314
    %v456 = vpack.c.b16 %v318, %v315
    %v457 = vpack.c.b16 %v319, %v316
    %v458 = vpack.c.b16 %v323, %v320
    %v459 = vpack.c.b16 %v324, %v321
    %v460 = vpack.c.b16 %v325, %v322
    %v461 = vpack.c.b16 %v329, %v326
    %v462 = vpack.c.b16 %v330, %v327
    %v463 = vpack.c.b16 %v331, %v328
    %v464 = vpack.c.b16 %v335, %v332
    %v465 = vpack.c.b16 %v336, %v333
    %v466 = vpack.c.b16 %v337, %v334
    %v467 = vpack.c.b16 %v341, %v338
    %v468 = vpack.c.b16 %v342, %v339
    %v469 = vpack.c.b16 %v343, %v340
    %v470 = vpack.c.b16 %v347, %v344
    %v471 = vpack.c.b16 %v348, %v345
    %v472 = vpack.c.b16 %v349, %v346
    %v473 = vpack.c.b16 %v353, %v350
    %v474 = vpack.c.b16 %v354, %v351
    %v475 = vpack.c.b16 %v355, %v352
    %v476 = vpack.c.b16 %v359, %v356
    %v477 = vpack.c.b16 %v360, %v357
    %v478 = vpack.c.b16 %v361, %v358
    %v479 = vpack.c.b16 %v365, %v362
    %v480 = vpack.c.b16 %v366, %v363
    %v481 = vpack.c.b16 %v367, %v364
    %v482 = vpack.c.b16 %v371, %v368
    %v483 = vpack.c.b16 %v372, %v369
    %v484 = vpack.c.b16 %v373, %v370
    %v485 = vpack.c.b16 %v377, %v374
    %v486 = vpack.c.b16 %v378, %v375
    %v487 = vpack.c.b16 %v379, %v376
    %v488 = vpack.c.b16 %v383, %v380
    %v489 = vpack.c.b16 %v384, %v381
    %v490 = vpack.c.b16 %v385, %v382
    %v491 = vpack.c.b16 %v389, %v386
    %v492 = vpack.c.b16 %v390, %v387
    %v493 = vpack.c.b16 %v391, %v388
    %v494 = vpack.c.b16 %v395, %v392
    %v495 = vpack.c.b16 %v396, %v393
    %v496 = vpack.c.b16 %v397, %v394
    %v497 = vpack.c.b16 %v401, %v398
    %v498 = vpack.c.b16 %v402, %v399
    %v499 = vpack.c.b16 %v403, %v400
    %v500 = vpack.c.b16 %v407, %v404
    %v501 = vpack.c.b16 %v408, %v405
    %v502 = vpack.c.b16 %v409, %v406
    %v503 = vpack.c.b16 %v413, %v410
    %v504 = vpack.c.b16 %v414, %v411
    %v505 = vpack.c.b16 %v415, %v412
    %v506 = vpack.c.b16 %v419, %v416
    %v507 = vpack.c.b16 %v420, %v417
    %v508 = vpack.c.b16 %v421, %v418
    %v509 = vpack.c.b16 %v425, %v422
    %v510 = vpack.c.b16 %v426, %v423
    %v511 = vpack.c.b16 %v427, %v424
    %v512 = vpack.c.b16 %v431, %v428
    %v513 = vpack.c.b16 %v432, %v429
    %v514 = vpack.c.b16 %v433, %v430
    %v515 = vpack.c.b16 %v437, %v434
    %v516 = vpack.c.b16 %v438, %v435
    %v517 = vpack.c.b16 %v439, %v436
    %v518 = vpack.c.b16 %v443, %v440
    %v519 = vpack.c.b16 %v444, %v441
    %v520 = vpack.c.b16 %v445, %v442
    %v521 = vpack.c.b16 %v449, %v446
    %v522 = vpack.c.b16 %v450, %v447
    %v523 = vpack.c.b16 %v451, %v448
    %596 = vmatpush.bf16.msra.mxu0 %v195
    %597 = vmatpush.bf16.msra.mxu0 %v194
    %598 = vmatpush.bf16.msra.mxu0 %v193
    %599 = vmatpush.bf16.msra.mxu0 %v192
    %600 = vmatpush.bf16.msra.mxu0 %v191
    %601 = vmatpush.bf16.msra.mxu0 %v190
    %602 = vmatpush.bf16.msra.mxu0 %v189
    %603 = vmatpush.bf16.msra.mxu0 %v188
    %604 = vmatmul.bf16.gmra.mxu0 %v452
    %v605 = vpop.f32.mrf.mxu0
    %v606 = vadd.f32 0.0, %v605
    %v607 = vpop.f32.mrf.mxu0
    %v608 = vadd.f32 0.0, %v607
    %609 = vmatmul.bf16.gmra.mxu0 %v455
    %v610 = vpop.f32.mrf.mxu0
    %v611 = vadd.f32 0.0, %v610
    %v612 = vpop.f32.mrf.mxu0
    %v613 = vadd.f32 0.0, %v612
    %614 = vmatmul.bf16.gmra.mxu0 %v458
    %v615 = vpop.f32.mrf.mxu0
    %v616 = vadd.f32 0.0, %v615
    %v617 = vpop.f32.mrf.mxu0
    %v618 = vadd.f32 0.0, %v617
    %619 = vmatmul.bf16.gmra.mxu0 %v461
    %v620 = vpop.f32.mrf.mxu0
    %v621 = vadd.f32 0.0, %v620
    %v622 = vpop.f32.mrf.mxu0
    %v623 = vadd.f32 0.0, %v622
    %624 = vmatmul.bf16.gmra.mxu0 %v464
    %v625 = vpop.f32.mrf.mxu0
    %v626 = vadd.f32 0.0, %v625
    %v627 = vpop.f32.mrf.mxu0
    %v628 = vadd.f32 0.0, %v627
    %629 = vmatmul.bf16.gmra.mxu0 %v467
    %v630 = vpop.f32.mrf.mxu0
    %v631 = vadd.f32 0.0, %v630
    %v632 = vpop.f32.mrf.mxu0
    %v633 = vadd.f32 0.0, %v632
    %634 = vmatmul.bf16.gmra.mxu0 %v470
    %v635 = vpop.f32.mrf.mxu0
    %v636 = vadd.f32 0.0, %v635
    %v637 = vpop.f32.mrf.mxu0
    %v638 = vadd.f32 0.0, %v637
    %639 = vmatmul.bf16.gmra.mxu0 %v473
    %v640 = vpop.f32.mrf.mxu0
    %v641 = vadd.f32 0.0, %v640
    %v642 = vpop.f32.mrf.mxu0
    %v643 = vadd.f32 0.0, %v642
    %644 = vmatmul.bf16.gmra.mxu0 %v476
    %v645 = vpop.f32.mrf.mxu0
    %v646 = vadd.f32 0.0, %v645
    %v647 = vpop.f32.mrf.mxu0
    %v648 = vadd.f32 0.0, %v647
    %649 = vmatmul.bf16.gmra.mxu0 %v479
    %v650 = vpop.f32.mrf.mxu0
    %v651 = vadd.f32 0.0, %v650
    %v652 = vpop.f32.mrf.mxu0
    %v653 = vadd.f32 0.0, %v652
    %654 = vmatmul.bf16.gmra.mxu0 %v482
    %v655 = vpop.f32.mrf.mxu0
    %v656 = vadd.f32 0.0, %v655
    %v657 = vpop.f32.mrf.mxu0
    %v658 = vadd.f32 0.0, %v657
    %659 = vmatmul.bf16.gmra.mxu0 %v485
    %v660 = vpop.f32.mrf.mxu0
    %v661 = vadd.f32 0.0, %v660
    %v662 = vpop.f32.mrf.mxu0
    %v663 = vadd.f32 0.0, %v662
    %664 = vmatmul.bf16.gmra.mxu0 %v488
    %v665 = vpop.f32.mrf.mxu0
    %v666 = vadd.f32 0.0, %v665
    %v667 = vpop.f32.mrf.mxu0
    %v668 = vadd.f32 0.0, %v667
    %669 = vmatmul.bf16.gmra.mxu0 %v491
    %v670 = vpop.f32.mrf.mxu0
    %v671 = vadd.f32 0.0, %v670
    %v672 = vpop.f32.mrf.mxu0
    %v673 = vadd.f32 0.0, %v672
    %674 = vmatmul.bf16.gmra.mxu0 %v494
    %v675 = vpop.f32.mrf.mxu0
    %v676 = vadd.f32 0.0, %v675
    %v677 = vpop.f32.mrf.mxu0
    %v678 = vadd.f32 0.0, %v677
    %679 = vmatmul.bf16.gmra.mxu0 %v497
    %v680 = vpop.f32.mrf.mxu0
    %v681 = vadd.f32 0.0, %v680
    %v682 = vpop.f32.mrf.mxu0
    %v683 = vadd.f32 0.0, %v682
    %684 = vmatmul.bf16.gmra.mxu0 %v500
    %v685 = vpop.f32.mrf.mxu0
    %v686 = vadd.f32 0.0, %v685
    %v687 = vpop.f32.mrf.mxu0
    %v688 = vadd.f32 0.0, %v687
    %689 = vmatmul.bf16.gmra.mxu0 %v503
    %v690 = vpop.f32.mrf.mxu0
    %v691 = vadd.f32 0.0, %v690
    %v692 = vpop.f32.mrf.mxu0
    %v693 = vadd.f32 0.0, %v692
    %694 = vmatmul.bf16.gmra.mxu0 %v506
    %v695 = vpop.f32.mrf.mxu0
    %v696 = vadd.f32 0.0, %v695
    %v697 = vpop.f32.mrf.mxu0
    %v698 = vadd.f32 0.0, %v697
    %699 = vmatmul.bf16.gmra.mxu0 %v509
    %v700 = vpop.f32.mrf.mxu0
    %v701 = vadd.f32 0.0, %v700
    %v702 = vpop.f32.mrf.mxu0
    %v703 = vadd.f32 0.0, %v702
    %704 = vmatmul.bf16.gmra.mxu0 %v512
    %v705 = vpop.f32.mrf.mxu0
    %v706 = vadd.f32 0.0, %v705
    %v707 = vpop.f32.mrf.mxu0
    %v708 = vadd.f32 0.0, %v707
    %709 = vmatmul.bf16.gmra.mxu0 %v515
    %v710 = vpop.f32.mrf.mxu0
    %v711 = vadd.f32 0.0, %v710
    %v712 = vpop.f32.mrf.mxu0
    %v713 = vadd.f32 0.0, %v712
    %714 = vmatmul.bf16.gmra.mxu0 %v518
    %v715 = vpop.f32.mrf.mxu0
    %v716 = vadd.f32 0.0, %v715
    %v717 = vpop.f32.mrf.mxu0
    %v718 = vadd.f32 0.0, %v717
    %719 = vmatmul.bf16.gmra.mxu0 %v521
    %v720 = vpop.f32.mrf.mxu0
    %v721 = vadd.f32 0.0, %v720
    %v722 = vpop.f32.mrf.mxu0
    %v723 = vadd.f32 0.0, %v722
    %724 = vdwg.mxu0
    %725 = vmatpush.bf16.msra.mxu0 %v203
    %726 = vmatpush.bf16.msra.mxu0 %v202
    %727 = vmatpush.bf16.msra.mxu0 %v201
    %728 = vmatpush.bf16.msra.mxu0 %v200
    %729 = vmatpush.bf16.msra.mxu0 %v199
    %730 = vmatpush.bf16.msra.mxu0 %v198
    %731 = vmatpush.bf16.msra.mxu0 %v197
    %732 = vmatpush.bf16.msra.mxu0 %v196
    %733 = vmatmul.bf16.gmra.mxu0 %v453
    %v734 = vpop.f32.mrf.mxu0
    %v735 = vadd.f32 %v606, %v734
    %v736 = vpop.f32.mrf.mxu0
    %v737 = vadd.f32 %v608, %v736
    %738 = vmatmul.bf16.gmra.mxu0 %v456
    %v739 = vpop.f32.mrf.mxu0
    %v740 = vadd.f32 %v611, %v739
    %v741 = vpop.f32.mrf.mxu0
    %v742 = vadd.f32 %v613, %v741
    %743 = vmatmul.bf16.gmra.mxu0 %v459
    %v744 = vpop.f32.mrf.mxu0
    %v745 = vadd.f32 %v616, %v744
    %v746 = vpop.f32.mrf.mxu0
    %v747 = vadd.f32 %v618, %v746
    %748 = vmatmul.bf16.gmra.mxu0 %v462
    %v749 = vpop.f32.mrf.mxu0
    %v750 = vadd.f32 %v621, %v749
    %v751 = vpop.f32.mrf.mxu0
    %v752 = vadd.f32 %v623, %v751
    %753 = vmatmul.bf16.gmra.mxu0 %v465
    %v754 = vpop.f32.mrf.mxu0
    %v755 = vadd.f32 %v626, %v754
    %v756 = vpop.f32.mrf.mxu0
    %v757 = vadd.f32 %v628, %v756
    %758 = vmatmul.bf16.gmra.mxu0 %v468
    %v759 = vpop.f32.mrf.mxu0
    %v760 = vadd.f32 %v631, %v759
    %v761 = vpop.f32.mrf.mxu0
    %v762 = vadd.f32 %v633, %v761
    %763 = vmatmul.bf16.gmra.mxu0 %v471
    %v764 = vpop.f32.mrf.mxu0
    %v765 = vadd.f32 %v636, %v764
    %v766 = vpop.f32.mrf.mxu0
    %v767 = vadd.f32 %v638, %v766
    %768 = vmatmul.bf16.gmra.mxu0 %v474
    %v769 = vpop.f32.mrf.mxu0
    %v770 = vadd.f32 %v641, %v769
    %v771 = vpop.f32.mrf.mxu0
    %v772 = vadd.f32 %v643, %v771
    %773 = vmatmul.bf16.gmra.mxu0 %v477
    %v774 = vpop.f32.mrf.mxu0
    %v775 = vadd.f32 %v646, %v774
    %v776 = vpop.f32.mrf.mxu0
    %v777 = vadd.f32 %v648, %v776
    %778 = vmatmul.bf16.gmra.mxu0 %v480
    %v779 = vpop.f32.mrf.mxu0
    %v780 = vadd.f32 %v651, %v779
    %v781 = vpop.f32.mrf.mxu0
    %v782 = vadd.f32 %v653, %v781
    %783 = vmatmul.bf16.gmra.mxu0 %v483
    %v784 = vpop.f32.mrf.mxu0
    %v785 = vadd.f32 %v656, %v784
    %v786 = vpop.f32.mrf.mxu0
    %v787 = vadd.f32 %v658, %v786
    %788 = vmatmul.bf16.gmra.mxu0 %v486
    %v789 = vpop.f32.mrf.mxu0
    %v790 = vadd.f32 %v661, %v789
    %v791 = vpop.f32.mrf.mxu0
    %v792 = vadd.f32 %v663, %v791
    %793 = vmatmul.bf16.gmra.mxu0 %v489
    %v794 = vpop.f32.mrf.mxu0
    %v795 = vadd.f32 %v666, %v794
    %v796 = vpop.f32.mrf.mxu0
    %v797 = vadd.f32 %v668, %v796
    %798 = vmatmul.bf16.gmra.mxu0 %v492
    %v799 = vpop.f32.mrf.mxu0
    %v800 = vadd.f32 %v671, %v799
    %v801 = vpop.f32.mrf.mxu0
    %v802 = vadd.f32 %v673, %v801
    %803 = vmatmul.bf16.gmra.mxu0 %v495
    %v804 = vpop.f32.mrf.mxu0
    %v805 = vadd.f32 %v676, %v804
    %v806 = vpop.f32.mrf.mxu0
    %v807 = vadd.f32 %v678, %v806
    %808 = vmatmul.bf16.gmra.mxu0 %v498
    %v809 = vpop.f32.mrf.mxu0
    %v810 = vadd.f32 %v681, %v809
    %v811 = vpop.f32.mrf.mxu0
    %v812 = vadd.f32 %v683, %v811
    %813 = vmatmul.bf16.gmra.mxu0 %v501
    %v814 = vpop.f32.mrf.mxu0
    %v815 = vadd.f32 %v686, %v814
    %v816 = vpop.f32.mrf.mxu0
    %v817 = vadd.f32 %v688, %v816
    %818 = vmatmul.bf16.gmra.mxu0 %v504
    %v819 = vpop.f32.mrf.mxu0
    %v820 = vadd.f32 %v691, %v819
    %v821 = vpop.f32.mrf.mxu0
    %v822 = vadd.f32 %v693, %v821
    %823 = vmatmul.bf16.gmra.mxu0 %v507
    %v824 = vpop.f32.mrf.mxu0
    %v825 = vadd.f32 %v696, %v824
    %v826 = vpop.f32.mrf.mxu0
    %v827 = vadd.f32 %v698, %v826
    %828 = vmatmul.bf16.gmra.mxu0 %v510
    %v829 = vpop.f32.mrf.mxu0
    %v830 = vadd.f32 %v701, %v829
    %v831 = vpop.f32.mrf.mxu0
    %v832 = vadd.f32 %v703, %v831
    %833 = vmatmul.bf16.gmra.mxu0 %v513
    %v834 = vpop.f32.mrf.mxu0
    %v835 = vadd.f32 %v706, %v834
    %v836 = vpop.f32.mrf.mxu0
    %v837 = vadd.f32 %v708, %v836
    %838 = vmatmul.bf16.gmra.mxu0 %v516
    %v839 = vpop.f32.mrf.mxu0
    %v840 = vadd.f32 %v711, %v839
    %v841 = vpop.f32.mrf.mxu0
    %v842 = vadd.f32 %v713, %v841
    %843 = vmatmul.bf16.gmra.mxu0 %v519
    %v844 = vpop.f32.mrf.mxu0
    %v845 = vadd.f32 %v716, %v844
    %v846 = vpop.f32.mrf.mxu0
    %v847 = vadd.f32 %v718, %v846
    %848 = vmatmul.bf16.gmra.mxu0 %v522
    %v849 = vpop.f32.mrf.mxu0
    %v850 = vadd.f32 %v721, %v849
    %v851 = vpop.f32.mrf.mxu0
    %v852 = vadd.f32 %v723, %v851
    %853 = vdwg.mxu0
    %854 = vmatpush.bf16.msra.mxu0 %v211
    %855 = vmatpush.bf16.msra.mxu0 %v210
    %856 = vmatpush.bf16.msra.mxu0 %v209
    %857 = vmatpush.bf16.msra.mxu0 %v208
    %858 = vmatpush.bf16.msra.mxu0 %v207
    %859 = vmatpush.bf16.msra.mxu0 %v206
    %860 = vmatpush.bf16.msra.mxu0 %v205
    %861 = vmatpush.bf16.msra.mxu0 %v204
    %862 = vmatmul.bf16.gmra.mxu0 %v454
    %v863 = vpop.f32.mrf.mxu0
    %v864 = vadd.f32 %v735, %v863
    %v865 = vpop.f32.mrf.mxu0
    %v866 = vadd.f32 %v737, %v865
    %867 = vmatmul.bf16.gmra.mxu0 %v457
    %v868 = vpop.f32.mrf.mxu0
    %v869 = vadd.f32 %v740, %v868
    %v870 = vpop.f32.mrf.mxu0
    %v871 = vadd.f32 %v742, %v870
    %872 = vmatmul.bf16.gmra.mxu0 %v460
    %v873 = vpop.f32.mrf.mxu0
    %v874 = vadd.f32 %v745, %v873
    %v875 = vpop.f32.mrf.mxu0
    %v876 = vadd.f32 %v747, %v875
    %877 = vmatmul.bf16.gmra.mxu0 %v463
    %v878 = vpop.f32.mrf.mxu0
    %v879 = vadd.f32 %v750, %v878
    %v880 = vpop.f32.mrf.mxu0
    %v881 = vadd.f32 %v752, %v880
    %882 = vmatmul.bf16.gmra.mxu0 %v466
    %v883 = vpop.f32.mrf.mxu0
    %v884 = vadd.f32 %v755, %v883
    %v885 = vpop.f32.mrf.mxu0
    %v886 = vadd.f32 %v757, %v885
    %887 = vmatmul.bf16.gmra.mxu0 %v469
    %v888 = vpop.f32.mrf.mxu0
    %v889 = vadd.f32 %v760, %v888
    %v890 = vpop.f32.mrf.mxu0
    %v891 = vadd.f32 %v762, %v890
    %892 = vmatmul.bf16.gmra.mxu0 %v472
    %v893 = vpop.f32.mrf.mxu0
    %v894 = vadd.f32 %v765, %v893
    %v895 = vpop.f32.mrf.mxu0
    %v896 = vadd.f32 %v767, %v895
    %897 = vmatmul.bf16.gmra.mxu0 %v475
    %v898 = vpop.f32.mrf.mxu0
    %v899 = vadd.f32 %v770, %v898
    %v900 = vpop.f32.mrf.mxu0
    %v901 = vadd.f32 %v772, %v900
    %902 = vmatmul.bf16.gmra.mxu0 %v478
    %v903 = vpop.f32.mrf.mxu0
    %v904 = vadd.f32 %v775, %v903
    %v905 = vpop.f32.mrf.mxu0
    %v906 = vadd.f32 %v777, %v905
    %907 = vmatmul.bf16.gmra.mxu0 %v481
    %v908 = vpop.f32.mrf.mxu0
    %v909 = vadd.f32 %v780, %v908
    %v910 = vpop.f32.mrf.mxu0
    %v911 = vadd.f32 %v782, %v910
    %912 = vmatmul.bf16.gmra.mxu0 %v484
    %v913 = vpop.f32.mrf.mxu0
    %v914 = vadd.f32 %v785, %v913
    %v915 = vpop.f32.mrf.mxu0
    %v916 = vadd.f32 %v787, %v915
    %917 = vmatmul.bf16.gmra.mxu0 %v487
    %v918 = vpop.f32.mrf.mxu0
    %v919 = vadd.f32 %v790, %v918
    %v920 = vpop.f32.mrf.mxu0
    %v921 = vadd.f32 %v792, %v920
    %922 = vmatmul.bf16.gmra.mxu0 %v490
    %v923 = vpop.f32.mrf.mxu0
    %v924 = vadd.f32 %v795, %v923
    %v925 = vpop.f32.mrf.mxu0
    %v926 = vadd.f32 %v797, %v925
    %927 = vmatmul.bf16.gmra.mxu0 %v493
    %v928 = vpop.f32.mrf.mxu0
    %v929 = vadd.f32 %v800, %v928
    %v930 = vpop.f32.mrf.mxu0
    %v931 = vadd.f32 %v802, %v930
    %932 = vmatmul.bf16.gmra.mxu0 %v496
    %v933 = vpop.f32.mrf.mxu0
    %v934 = vadd.f32 %v805, %v933
    %v935 = vpop.f32.mrf.mxu0
    %v936 = vadd.f32 %v807, %v935
    %937 = vmatmul.bf16.gmra.mxu0 %v499
    %v938 = vpop.f32.mrf.mxu0
    %v939 = vadd.f32 %v810, %v938
    %v940 = vpop.f32.mrf.mxu0
    %v941 = vadd.f32 %v812, %v940
    %942 = vmatmul.bf16.gmra.mxu0 %v502
    %v943 = vpop.f32.mrf.mxu0
    %v944 = vadd.f32 %v815, %v943
    %v945 = vpop.f32.mrf.mxu0
    %v946 = vadd.f32 %v817, %v945
    %947 = vmatmul.bf16.gmra.mxu0 %v505
    %v948 = vpop.f32.mrf.mxu0
    %v949 = vadd.f32 %v820, %v948
    %v950 = vpop.f32.mrf.mxu0
    %v951 = vadd.f32 %v822, %v950
    %952 = vmatmul.bf16.gmra.mxu0 %v508
    %v953 = vpop.f32.mrf.mxu0
    %v954 = vadd.f32 %v825, %v953
    %v955 = vpop.f32.mrf.mxu0
    %v956 = vadd.f32 %v827, %v955
    %957 = vmatmul.bf16.gmra.mxu0 %v511
    %v958 = vpop.f32.mrf.mxu0
    %v959 = vadd.f32 %v830, %v958
    %v960 = vpop.f32.mrf.mxu0
    %v961 = vadd.f32 %v832, %v960
    %962 = vmatmul.bf16.gmra.mxu0 %v514
    %v963 = vpop.f32.mrf.mxu0
    %v964 = vadd.f32 %v835, %v963
    %v965 = vpop.f32.mrf.mxu0
    %v966 = vadd.f32 %v837, %v965
    %967 = vmatmul.bf16.gmra.mxu0 %v517
    %v968 = vpop.f32.mrf.mxu0
    %v969 = vadd.f32 %v840, %v968
    %v970 = vpop.f32.mrf.mxu0
    %v971 = vadd.f32 %v842, %v970
    %972 = vmatmul.bf16.gmra.mxu0 %v520
    %v973 = vpop.f32.mrf.mxu0
    %v974 = vadd.f32 %v845, %v973
    %v975 = vpop.f32.mrf.mxu0
    %v976 = vadd.f32 %v847, %v975
    %977 = vmatmul.bf16.gmra.mxu0 %v523
    %v978 = vpop.f32.mrf.mxu0
    %v979 = vadd.f32 %v850, %v978
    %v980 = vpop.f32.mrf.mxu0
    %v981 = vadd.f32 %v852, %v980
    %982 = vdwg.mxu0
    %v983 = vadd.f32 %v140, %v864
    %v984 = vadd.f32 %v141, %v866
    %v985 = vadd.f32 %v142, %v869
    %v986 = vadd.f32 %v143, %v871
    %v987 = vadd.f32 %v144, %v874
    %v988 = vadd.f32 %v145, %v876
    %v989 = vadd.f32 %v146, %v879
    %v990 = vadd.f32 %v147, %v881
    %v991 = vadd.f32 %v148, %v884
    %v992 = vadd.f32 %v149, %v886
    %v993 = vadd.f32 %v150, %v889
    %v994 = vadd.f32 %v151, %v891
    %v995 = vadd.f32 %v152, %v894
    %v996 = vadd.f32 %v153, %v896
    %v997 = vadd.f32 %v154, %v899
    %v998 = vadd.f32 %v155, %v901
    %v999 = vadd.f32 %v156, %v904
    %v1000 = vadd.f32 %v157, %v906
    %v1001 = vadd.f32 %v158, %v909
    %v1002 = vadd.f32 %v159, %v911
    %v1003 = vadd.f32 %v160, %v914
    %v1004 = vadd.f32 %v161, %v916
    %v1005 = vadd.f32 %v162, %v919
    %v1006 = vadd.f32 %v163, %v921
    %v1007 = vadd.f32 %v164, %v924
    %v1008 = vadd.f32 %v165, %v926
    %v1009 = vadd.f32 %v166, %v929
    %v1010 = vadd.f32 %v167, %v931
    %v1011 = vadd.f32 %v168, %v934
    %v1012 = vadd.f32 %v169, %v936
    %v1013 = vadd.f32 %v170, %v939
    %v1014 = vadd.f32 %v171, %v941
    %v1015 = vadd.f32 %v172, %v944
    %v1016 = vadd.f32 %v173, %v946
    %v1017 = vadd.f32 %v174, %v949
    %v1018 = vadd.f32 %v175, %v951
    %v1019 = vadd.f32 %v176, %v954
    %v1020 = vadd.f32 %v177, %v956
    %v1021 = vadd.f32 %v178, %v959
    %v1022 = vadd.f32 %v179, %v961
    %v1023 = vadd.f32 %v180, %v964
    %v1024 = vadd.f32 %v181, %v966
    %v1025 = vadd.f32 %v182, %v969
    %v1026 = vadd.f32 %v183, %v971
    %v1027 = vadd.f32 %v184, %v974
    %v1028 = vadd.f32 %v185, %v976
    %v1029 = vadd.f32 %v186, %v979
    %v1030 = vadd.f32 %v187, %v981
    %v1031 = vpack.c.bf16 %v866, %v864
    %v1032 = vpack.c.bf16 %v871, %v869
    %v1033 = vpack.c.bf16 %v876, %v874
    %v1034 = vpack.c.bf16 %v881, %v879
    %v1035 = vpack.c.bf16 %v886, %v884
    %v1036 = vpack.c.bf16 %v891, %v889
    %v1037 = vpack.c.bf16 %v896, %v894
    %v1038 = vpack.c.bf16 %v901, %v899
    %v1039 = vpack.c.bf16 %v906, %v904
    %v1040 = vpack.c.bf16 %v911, %v909
    %v1041 = vpack.c.bf16 %v916, %v914
    %v1042 = vpack.c.bf16 %v921, %v919
    %v1043 = vpack.c.bf16 %v926, %v924
    %v1044 = vpack.c.bf16 %v931, %v929
    %v1045 = vpack.c.bf16 %v936, %v934
    %v1046 = vpack.c.bf16 %v941, %v939
    %v1047 = vpack.c.bf16 %v946, %v944
    %v1048 = vpack.c.bf16 %v951, %v949
    %v1049 = vpack.c.bf16 %v956, %v954
    %v1050 = vpack.c.bf16 %v961, %v959
    %v1051 = vpack.c.bf16 %v966, %v964
    %v1052 = vpack.c.bf16 %v971, %v969
    %v1053 = vpack.c.bf16 %v976, %v974
    %v1054 = vpack.c.bf16 %v981, %v979
    %1055 = vmatpush.bf16.msra.mxu0 %v1038
    %1056 = vmatpush.bf16.msra.mxu0 %v1037
    %1057 = vmatpush.bf16.msra.mxu0 %v1036
    %1058 = vmatpush.bf16.msra.mxu0 %v1035
    %1059 = vmatpush.bf16.msra.mxu0 %v1034
    %1060 = vmatpush.bf16.msra.mxu0 %v1033
    %1061 = vmatpush.bf16.msra.mxu0 %v1032
    %1062 = vmatpush.bf16.msra.mxu0 %v1031
    %1063 = vmatmul.bf16.gmra.mxu0 %v452
    %v1064 = vpop.f32.mrf.mxu0
    %v1065 = vadd.f32 0.0, %v1064
    %v1066 = vpop.f32.mrf.mxu0
    %v1067 = vadd.f32 0.0, %v1066
    %1068 = vmatmul.bf16.gmra.mxu0 %v455
    %v1069 = vpop.f32.mrf.mxu0
    %v1070 = vadd.f32 0.0, %v1069
    %v1071 = vpop.f32.mrf.mxu0
    %v1072 = vadd.f32 0.0, %v1071
    %1073 = vmatmul.bf16.gmra.mxu0 %v458
    %v1074 = vpop.f32.mrf.mxu0
    %v1075 = vadd.f32 0.0, %v1074
    %v1076 = vpop.f32.mrf.mxu0
    %v1077 = vadd.f32 0.0, %v1076
    %1078 = vmatmul.bf16.gmra.mxu0 %v461
    %v1079 = vpop.f32.mrf.mxu0
    %v1080 = vadd.f32 0.0, %v1079
    %v1081 = vpop.f32.mrf.mxu0
    %v1082 = vadd.f32 0.0, %v1081
    %1083 = vmatmul.bf16.gmra.mxu0 %v464
    %v1084 = vpop.f32.mrf.mxu0
    %v1085 = vadd.f32 0.0, %v1084
    %v1086 = vpop.f32.mrf.mxu0
    %v1087 = vadd.f32 0.0, %v1086
    %1088 = vmatmul.bf16.gmra.mxu0 %v467
    %v1089 = vpop.f32.mrf.mxu0
    %v1090 = vadd.f32 0.0, %v1089
    %v1091 = vpop.f32.mrf.mxu0
    %v1092 = vadd.f32 0.0, %v1091
    %1093 = vmatmul.bf16.gmra.mxu0 %v470
    %v1094 = vpop.f32.mrf.mxu0
    %v1095 = vadd.f32 0.0, %v1094
    %v1096 = vpop.f32.mrf.mxu0
    %v1097 = vadd.f32 0.0, %v1096
    %1098 = vmatmul.bf16.gmra.mxu0 %v473
    %v1099 = vpop.f32.mrf.mxu0
    %v1100 = vadd.f32 0.0, %v1099
    %v1101 = vpop.f32.mrf.mxu0
    %v1102 = vadd.f32 0.0, %v1101
    %1103 = vmatmul.bf16.gmra.mxu0 %v476
    %v1104 = vpop.f32.mrf.mxu0
    %v1105 = vadd.f32 0.0, %v1104
    %v1106 = vpop.f32.mrf.mxu0
    %v1107 = vadd.f32 0.0, %v1106
    %1108 = vmatmul.bf16.gmra.mxu0 %v479
    %v1109 = vpop.f32.mrf.mxu0
    %v1110 = vadd.f32 0.0, %v1109
    %v1111 = vpop.f32.mrf.mxu0
    %v1112 = vadd.f32 0.0, %v1111
    %1113 = vmatmul.bf16.gmra.mxu0 %v482
    %v1114 = vpop.f32.mrf.mxu0
    %v1115 = vadd.f32 0.0, %v1114
    %v1116 = vpop.f32.mrf.mxu0
    %v1117 = vadd.f32 0.0, %v1116
    %1118 = vmatmul.bf16.gmra.mxu0 %v485
    %v1119 = vpop.f32.mrf.mxu0
    %v1120 = vadd.f32 0.0, %v1119
    %v1121 = vpop.f32.mrf.mxu0
    %v1122 = vadd.f32 0.0, %v1121
    %1123 = vmatmul.bf16.gmra.mxu0 %v488
    %v1124 = vpop.f32.mrf.mxu0
    %v1125 = vadd.f32 0.0, %v1124
    %v1126 = vpop.f32.mrf.mxu0
    %v1127 = vadd.f32 0.0, %v1126
    %1128 = vmatmul.bf16.gmra.mxu0 %v491
    %v1129 = vpop.f32.mrf.mxu0
    %v1130 = vadd.f32 0.0, %v1129
    %v1131 = vpop.f32.mrf.mxu0
    %v1132 = vadd.f32 0.0, %v1131
    %1133 = vmatmul.bf16.gmra.mxu0 %v494
    %v1134 = vpop.f32.mrf.mxu0
    %v1135 = vadd.f32 0.0, %v1134
    %v1136 = vpop.f32.mrf.mxu0
    %v1137 = vadd.f32 0.0, %v1136
    %1138 = vmatmul.bf16.gmra.mxu0 %v497
    %v1139 = vpop.f32.mrf.mxu0
    %v1140 = vadd.f32 0.0, %v1139
    %v1141 = vpop.f32.mrf.mxu0
    %v1142 = vadd.f32 0.0, %v1141
    %1143 = vmatmul.bf16.gmra.mxu0 %v500
    %v1144 = vpop.f32.mrf.mxu0
    %v1145 = vadd.f32 0.0, %v1144
    %v1146 = vpop.f32.mrf.mxu0
    %v1147 = vadd.f32 0.0, %v1146
    %1148 = vmatmul.bf16.gmra.mxu0 %v503
    %v1149 = vpop.f32.mrf.mxu0
    %v1150 = vadd.f32 0.0, %v1149
    %v1151 = vpop.f32.mrf.mxu0
    %v1152 = vadd.f32 0.0, %v1151
    %1153 = vmatmul.bf16.gmra.mxu0 %v506
    %v1154 = vpop.f32.mrf.mxu0
    %v1155 = vadd.f32 0.0, %v1154
    %v1156 = vpop.f32.mrf.mxu0
    %v1157 = vadd.f32 0.0, %v1156
    %1158 = vmatmul.bf16.gmra.mxu0 %v509
    %v1159 = vpop.f32.mrf.mxu0
    %v1160 = vadd.f32 0.0, %v1159
    %v1161 = vpop.f32.mrf.mxu0
    %v1162 = vadd.f32 0.0, %v1161
    %1163 = vmatmul.bf16.gmra.mxu0 %v512
    %v1164 = vpop.f32.mrf.mxu0
    %v1165 = vadd.f32 0.0, %v1164
    %v1166 = vpop.f32.mrf.mxu0
    %v1167 = vadd.f32 0.0, %v1166
    %1168 = vmatmul.bf16.gmra.mxu0 %v515
    %v1169 = vpop.f32.mrf.mxu0
    %v1170 = vadd.f32 0.0, %v1169
    %v1171 = vpop.f32.mrf.mxu0
    %v1172 = vadd.f32 0.0, %v1171
    %1173 = vmatmul.bf16.gmra.mxu0 %v518
    %v1174 = vpop.f32.mrf.mxu0
    %v1175 = vadd.f32 0.0, %v1174
    %v1176 = vpop.f32.mrf.mxu0
    %v1177 = vadd.f32 0.0, %v1176
    %1178 = vmatmul.bf16.gmra.mxu0 %v521
    %v1179 = vpop.f32.mrf.mxu0
    %v1180 = vadd.f32 0.0, %v1179
    %v1181 = vpop.f32.mrf.mxu0
    %v1182 = vadd.f32 0.0, %v1181
    %1183 = vdwg.mxu0
    %1184 = vmatpush.bf16.msra.mxu0 %v1046
    %1185 = vmatpush.bf16.msra.mxu0 %v1045
    %1186 = vmatpush.bf16.msra.mxu0 %v1044
    %1187 = vmatpush.bf16.msra.mxu0 %v1043
    %1188 = vmatpush.bf16.msra.mxu0 %v1042
    %1189 = vmatpush.bf16.msra.mxu0 %v1041
    %1190 = vmatpush.bf16.msra.mxu0 %v1040
    %1191 = vmatpush.bf16.msra.mxu0 %v1039
    %1192 = vmatmul.bf16.gmra.mxu0 %v453
    %v1193 = vpop.f32.mrf.mxu0
    %v1194 = vadd.f32 %v1065, %v1193
    %v1195 = vpop.f32.mrf.mxu0
    %v1196 = vadd.f32 %v1067, %v1195
    %1197 = vmatmul.bf16.gmra.mxu0 %v456
    %v1198 = vpop.f32.mrf.mxu0
    %v1199 = vadd.f32 %v1070, %v1198
    %v1200 = vpop.f32.mrf.mxu0
    %v1201 = vadd.f32 %v1072, %v1200
    %1202 = vmatmul.bf16.gmra.mxu0 %v459
    %v1203 = vpop.f32.mrf.mxu0
    %v1204 = vadd.f32 %v1075, %v1203
    %v1205 = vpop.f32.mrf.mxu0
    %v1206 = vadd.f32 %v1077, %v1205
    %1207 = vmatmul.bf16.gmra.mxu0 %v462
    %v1208 = vpop.f32.mrf.mxu0
    %v1209 = vadd.f32 %v1080, %v1208
    %v1210 = vpop.f32.mrf.mxu0
    %v1211 = vadd.f32 %v1082, %v1210
    %1212 = vmatmul.bf16.gmra.mxu0 %v465
    %v1213 = vpop.f32.mrf.mxu0
    %v1214 = vadd.f32 %v1085, %v1213
    %v1215 = vpop.f32.mrf.mxu0
    %v1216 = vadd.f32 %v1087, %v1215
    %1217 = vmatmul.bf16.gmra.mxu0 %v468
    %v1218 = vpop.f32.mrf.mxu0
    %v1219 = vadd.f32 %v1090, %v1218
    %v1220 = vpop.f32.mrf.mxu0
    %v1221 = vadd.f32 %v1092, %v1220
    %1222 = vmatmul.bf16.gmra.mxu0 %v471
    %v1223 = vpop.f32.mrf.mxu0
    %v1224 = vadd.f32 %v1095, %v1223
    %v1225 = vpop.f32.mrf.mxu0
    %v1226 = vadd.f32 %v1097, %v1225
    %1227 = vmatmul.bf16.gmra.mxu0 %v474
    %v1228 = vpop.f32.mrf.mxu0
    %v1229 = vadd.f32 %v1100, %v1228
    %v1230 = vpop.f32.mrf.mxu0
    %v1231 = vadd.f32 %v1102, %v1230
    %1232 = vmatmul.bf16.gmra.mxu0 %v477
    %v1233 = vpop.f32.mrf.mxu0
    %v1234 = vadd.f32 %v1105, %v1233
    %v1235 = vpop.f32.mrf.mxu0
    %v1236 = vadd.f32 %v1107, %v1235
    %1237 = vmatmul.bf16.gmra.mxu0 %v480
    %v1238 = vpop.f32.mrf.mxu0
    %v1239 = vadd.f32 %v1110, %v1238
    %v1240 = vpop.f32.mrf.mxu0
    %v1241 = vadd.f32 %v1112, %v1240
    %1242 = vmatmul.bf16.gmra.mxu0 %v483
    %v1243 = vpop.f32.mrf.mxu0
    %v1244 = vadd.f32 %v1115, %v1243
    %v1245 = vpop.f32.mrf.mxu0
    %v1246 = vadd.f32 %v1117, %v1245
    %1247 = vmatmul.bf16.gmra.mxu0 %v486
    %v1248 = vpop.f32.mrf.mxu0
    %v1249 = vadd.f32 %v1120, %v1248
    %v1250 = vpop.f32.mrf.mxu0
    %v1251 = vadd.f32 %v1122, %v1250
    %1252 = vmatmul.bf16.gmra.mxu0 %v489
    %v1253 = vpop.f32.mrf.mxu0
    %v1254 = vadd.f32 %v1125, %v1253
    %v1255 = vpop.f32.mrf.mxu0
    %v1256 = vadd.f32 %v1127, %v1255
    %1257 = vmatmul.bf16.gmra.mxu0 %v492
    %v1258 = vpop.f32.mrf.mxu0
    %v1259 = vadd.f32 %v1130, %v1258
    %v1260 = vpop.f32.mrf.mxu0
    %v1261 = vadd.f32 %v1132, %v1260
    %1262 = vmatmul.bf16.gmra.mxu0 %v495
    %v1263 = vpop.f32.mrf.mxu0
    %v1264 = vadd.f32 %v1135, %v1263
    %v1265 = vpop.f32.mrf.mxu0
    %v1266 = vadd.f32 %v1137, %v1265
    %1267 = vmatmul.bf16.gmra.mxu0 %v498
    %v1268 = vpop.f32.mrf.mxu0
    %v1269 = vadd.f32 %v1140, %v1268
    %v1270 = vpop.f32.mrf.mxu0
    %v1271 = vadd.f32 %v1142, %v1270
    %1272 = vmatmul.bf16.gmra.mxu0 %v501
    %v1273 = vpop.f32.mrf.mxu0
    %v1274 = vadd.f32 %v1145, %v1273
    %v1275 = vpop.f32.mrf.mxu0
    %v1276 = vadd.f32 %v1147, %v1275
    %1277 = vmatmul.bf16.gmra.mxu0 %v504
    %v1278 = vpop.f32.mrf.mxu0
    %v1279 = vadd.f32 %v1150, %v1278
    %v1280 = vpop.f32.mrf.mxu0
    %v1281 = vadd.f32 %v1152, %v1280
    %1282 = vmatmul.bf16.gmra.mxu0 %v507
    %v1283 = vpop.f32.mrf.mxu0
    %v1284 = vadd.f32 %v1155, %v1283
    %v1285 = vpop.f32.mrf.mxu0
    %v1286 = vadd.f32 %v1157, %v1285
    %1287 = vmatmul.bf16.gmra.mxu0 %v510
    %v1288 = vpop.f32.mrf.mxu0
    %v1289 = vadd.f32 %v1160, %v1288
    %v1290 = vpop.f32.mrf.mxu0
    %v1291 = vadd.f32 %v1162, %v1290
    %1292 = vmatmul.bf16.gmra.mxu0 %v513
    %v1293 = vpop.f32.mrf.mxu0
    %v1294 = vadd.f32 %v1165, %v1293
    %v1295 = vpop.f32.mrf.mxu0
    %v1296 = vadd.f32 %v1167, %v1295
    %1297 = vmatmul.bf16.gmra.mxu0 %v516
    %v1298 = vpop.f32.mrf.mxu0
    %v1299 = vadd.f32 %v1170, %v1298
    %v1300 = vpop.f32.mrf.mxu0
    %v1301 = vadd.f32 %v1172, %v1300
    %1302 = vmatmul.bf16.gmra.mxu0 %v519
    %v1303 = vpop.f32.mrf.mxu0
    %v1304 = vadd.f32 %v1175, %v1303
    %v1305 = vpop.f32.mrf.mxu0
    %v1306 = vadd.f32 %v1177, %v1305
    %1307 = vmatmul.bf16.gmra.mxu0 %v522
    %v1308 = vpop.f32.mrf.mxu0
    %v1309 = vadd.f32 %v1180, %v1308
    %v1310 = vpop.f32.mrf.mxu0
    %v1311 = vadd.f32 %v1182, %v1310
    %1312 = vdwg.mxu0
    %1313 = vmatpush.bf16.msra.mxu0 %v1054
    %1314 = vmatpush.bf16.msra.mxu0 %v1053
    %1315 = vmatpush.bf16.msra.mxu0 %v1052
    %1316 = vmatpush.bf16.msra.mxu0 %v1051
    %1317 = vmatpush.bf16.msra.mxu0 %v1050
    %1318 = vmatpush.bf16.msra.mxu0 %v1049
    %1319 = vmatpush.bf16.msra.mxu0 %v1048
    %1320 = vmatpush.bf16.msra.mxu0 %v1047
    %1321 = vmatmul.bf16.gmra.mxu0 %v454
    %v1322 = vpop.f32.mrf.mxu0
    %v1323 = vadd.f32 %v1194, %v1322
    %v1324 = vpop.f32.mrf.mxu0
    %v1325 = vadd.f32 %v1196, %v1324
    %1326 = vmatmul.bf16.gmra.mxu0 %v457
    %v1327 = vpop.f32.mrf.mxu0
    %v1328 = vadd.f32 %v1199, %v1327
    %v1329 = vpop.f32.mrf.mxu0
    %v1330 = vadd.f32 %v1201, %v1329
    %1331 = vmatmul.bf16.gmra.mxu0 %v460
    %v1332 = vpop.f32.mrf.mxu0
    %v1333 = vadd.f32 %v1204, %v1332
    %v1334 = vpop.f32.mrf.mxu0
    %v1335 = vadd.f32 %v1206, %v1334
    %1336 = vmatmul.bf16.gmra.mxu0 %v463
    %v1337 = vpop.f32.mrf.mxu0
    %v1338 = vadd.f32 %v1209, %v1337
    %v1339 = vpop.f32.mrf.mxu0
    %v1340 = vadd.f32 %v1211, %v1339
    %1341 = vmatmul.bf16.gmra.mxu0 %v466
    %v1342 = vpop.f32.mrf.mxu0
    %v1343 = vadd.f32 %v1214, %v1342
    %v1344 = vpop.f32.mrf.mxu0
    %v1345 = vadd.f32 %v1216, %v1344
    %1346 = vmatmul.bf16.gmra.mxu0 %v469
    %v1347 = vpop.f32.mrf.mxu0
    %v1348 = vadd.f32 %v1219, %v1347
    %v1349 = vpop.f32.mrf.mxu0
    %v1350 = vadd.f32 %v1221, %v1349
    %1351 = vmatmul.bf16.gmra.mxu0 %v472
    %v1352 = vpop.f32.mrf.mxu0
    %v1353 = vadd.f32 %v1224, %v1352
    %v1354 = vpop.f32.mrf.mxu0
    %v1355 = vadd.f32 %v1226, %v1354
    %1356 = vmatmul.bf16.gmra.mxu0 %v475
    %v1357 = vpop.f32.mrf.mxu0
    %v1358 = vadd.f32 %v1229, %v1357
    %v1359 = vpop.f32.mrf.mxu0
    %v1360 = vadd.f32 %v1231, %v1359
    %1361 = vmatmul.bf16.gmra.mxu0 %v478
    %v1362 = vpop.f32.mrf.mxu0
    %v1363 = vadd.f32 %v1234, %v1362
    %v1364 = vpop.f32.mrf.mxu0
    %v1365 = vadd.f32 %v1236, %v1364
    %1366 = vmatmul.bf16.gmra.mxu0 %v481
    %v1367 = vpop.f32.mrf.mxu0
    %v1368 = vadd.f32 %v1239, %v1367
    %v1369 = vpop.f32.mrf.mxu0
    %v1370 = vadd.f32 %v1241, %v1369
    %1371 = vmatmul.bf16.gmra.mxu0 %v484
    %v1372 = vpop.f32.mrf.mxu0
    %v1373 = vadd.f32 %v1244, %v1372
    %v1374 = vpop.f32.mrf.mxu0
    %v1375 = vadd.f32 %v1246, %v1374
    %1376 = vmatmul.bf16.gmra.mxu0 %v487
    %v1377 = vpop.f32.mrf.mxu0
    %v1378 = vadd.f32 %v1249, %v1377
    %v1379 = vpop.f32.mrf.mxu0
    %v1380 = vadd.f32 %v1251, %v1379
    %1381 = vmatmul.bf16.gmra.mxu0 %v490
    %v1382 = vpop.f32.mrf.mxu0
    %v1383 = vadd.f32 %v1254, %v1382
    %v1384 = vpop.f32.mrf.mxu0
    %v1385 = vadd.f32 %v1256, %v1384
    %1386 = vmatmul.bf16.gmra.mxu0 %v493
    %v1387 = vpop.f32.mrf.mxu0
    %v1388 = vadd.f32 %v1259, %v1387
    %v1389 = vpop.f32.mrf.mxu0
    %v1390 = vadd.f32 %v1261, %v1389
    %1391 = vmatmul.bf16.gmra.mxu0 %v496
    %v1392 = vpop.f32.mrf.mxu0
    %v1393 = vadd.f32 %v1264, %v1392
    %v1394 = vpop.f32.mrf.mxu0
    %v1395 = vadd.f32 %v1266, %v1394
    %1396 = vmatmul.bf16.gmra.mxu0 %v499
    %v1397 = vpop.f32.mrf.mxu0
    %v1398 = vadd.f32 %v1269, %v1397
    %v1399 = vpop.f32.mrf.mxu0
    %v1400 = vadd.f32 %v1271, %v1399
    %1401 = vmatmul.bf16.gmra.mxu0 %v502
    %v1402 = vpop.f32.mrf.mxu0
    %v1403 = vadd.f32 %v1274, %v1402
    %v1404 = vpop.f32.mrf.mxu0
    %v1405 = vadd.f32 %v1276, %v1404
    %1406 = vmatmul.bf16.gmra.mxu0 %v505
    %v1407 = vpop.f32.mrf.mxu0
    %v1408 = vadd.f32 %v1279, %v1407
    %v1409 = vpop.f32.mrf.mxu0
    %v1410 = vadd.f32 %v1281, %v1409
    %1411 = vmatmul.bf16.gmra.mxu0 %v508
    %v1412 = vpop.f32.mrf.mxu0
    %v1413 = vadd.f32 %v1284, %v1412
    %v1414 = vpop.f32.mrf.mxu0
    %v1415 = vadd.f32 %v1286, %v1414
    %1416 = vmatmul.bf16.gmra.mxu0 %v511
    %v1417 = vpop.f32.mrf.mxu0
    %v1418 = vadd.f32 %v1289, %v1417
    %v1419 = vpop.f32.mrf.mxu0
    %v1420 = vadd.f32 %v1291, %v1419
    %1421 = vmatmul.bf16.gmra.mxu0 %v514
    %v1422 = vpop.f32.mrf.mxu0
    %v1423 = vadd.f32 %v1294, %v1422
    %v1424 = vpop.f32.mrf.mxu0
    %v1425 = vadd.f32 %v1296, %v1424
    %1426 = vmatmul.bf16.gmra.mxu0 %v517
    %v1427 = vpop.f32.mrf.mxu0
    %v1428 = vadd.f32 %v1299, %v1427
    %v1429 = vpop.f32.mrf.mxu0
    %v1430 = vadd.f32 %v1301, %v1429
    %1431 = vmatmul.bf16.gmra.mxu0 %v520
    %v1432 = vpop.f32.mrf.mxu0
    %v1433 = vadd.f32 %v1304, %v1432
    %v1434 = vpop.f32.mrf.mxu0
    %v1435 = vadd.f32 %v1306, %v1434
    %1436 = vmatmul.bf16.gmra.mxu0 %v523
    %v1437 = vpop.f32.mrf.mxu0
    %v1438 = vadd.f32 %v1309, %v1437
    %v1439 = vpop.f32.mrf.mxu0
    %v1440 = vadd.f32 %v1311, %v1439
    %1441 = vdwg.mxu0
    %v1442 = vadd.f32 %v983, %v1323
    %v1443 = vadd.f32 %v984, %v1325
    %v1444 = vadd.f32 %v985, %v1328
    %v1445 = vadd.f32 %v986, %v1330
    %v1446 = vadd.f32 %v987, %v1333
    %v1447 = vadd.f32 %v988, %v1335
    %v1448 = vadd.f32 %v989, %v1338
    %v1449 = vadd.f32 %v990, %v1340
    %v1450 = vadd.f32 %v991, %v1343
    %v1451 = vadd.f32 %v992, %v1345
    %v1452 = vadd.f32 %v993, %v1348
    %v1453 = vadd.f32 %v994, %v1350
    %v1454 = vadd.f32 %v995, %v1353
    %v1455 = vadd.f32 %v996, %v1355
    %v1456 = vadd.f32 %v997, %v1358
    %v1457 = vadd.f32 %v998, %v1360
    %v1458 = vadd.f32 %v999, %v1363
    %v1459 = vadd.f32 %v1000, %v1365
    %v1460 = vadd.f32 %v1001, %v1368
    %v1461 = vadd.f32 %v1002, %v1370
    %v1462 = vadd.f32 %v1003, %v1373
    %v1463 = vadd.f32 %v1004, %v1375
    %v1464 = vadd.f32 %v1005, %v1378
    %v1465 = vadd.f32 %v1006, %v1380
    %v1466 = vadd.f32 %v1007, %v1383
    %v1467 = vadd.f32 %v1008, %v1385
    %v1468 = vadd.f32 %v1009, %v1388
    %v1469 = vadd.f32 %v1010, %v1390
    %v1470 = vadd.f32 %v1011, %v1393
    %v1471 = vadd.f32 %v1012, %v1395
    %v1472 = vadd.f32 %v1013, %v1398
    %v1473 = vadd.f32 %v1014, %v1400
    %v1474 = vadd.f32 %v1015, %v1403
    %v1475 = vadd.f32 %v1016, %v1405
    %v1476 = vadd.f32 %v1017, %v1408
    %v1477 = vadd.f32 %v1018, %v1410
    %v1478 = vadd.f32 %v1019, %v1413
    %v1479 = vadd.f32 %v1020, %v1415
    %v1480 = vadd.f32 %v1021, %v1418
    %v1481 = vadd.f32 %v1022, %v1420
    %v1482 = vadd.f32 %v1023, %v1423
    %v1483 = vadd.f32 %v1024, %v1425
    %v1484 = vadd.f32 %v1025, %v1428
    %v1485 = vadd.f32 %v1026, %v1430
    %v1486 = vadd.f32 %v1027, %v1433
    %v1487 = vadd.f32 %v1028, %v1435
    %v1488 = vadd.f32 %v1029, %v1438
    %v1489 = vadd.f32 %v1030, %v1440
    %v1490 = vpack.c.bf16 %v1325, %v1323
    %v1491 = vpack.c.bf16 %v1330, %v1328
    %v1492 = vpack.c.bf16 %v1335, %v1333
    %v1493 = vpack.c.bf16 %v1340, %v1338
    %v1494 = vpack.c.bf16 %v1345, %v1343
    %v1495 = vpack.c.bf16 %v1350, %v1348
    %v1496 = vpack.c.bf16 %v1355, %v1353
    %v1497 = vpack.c.bf16 %v1360, %v1358
    %v1498 = vpack.c.bf16 %v1365, %v1363
    %v1499 = vpack.c.bf16 %v1370, %v1368
    %v1500 = vpack.c.bf16 %v1375, %v1373
    %v1501 = vpack.c.bf16 %v1380, %v1378
    %v1502 = vpack.c.bf16 %v1385, %v1383
    %v1503 = vpack.c.bf16 %v1390, %v1388
    %v1504 = vpack.c.bf16 %v1395, %v1393
    %v1505 = vpack.c.bf16 %v1400, %v1398
    %v1506 = vpack.c.bf16 %v1405, %v1403
    %v1507 = vpack.c.bf16 %v1410, %v1408
    %v1508 = vpack.c.bf16 %v1415, %v1413
    %v1509 = vpack.c.bf16 %v1420, %v1418
    %v1510 = vpack.c.bf16 %v1425, %v1423
    %v1511 = vpack.c.bf16 %v1430, %v1428
    %v1512 = vpack.c.bf16 %v1435, %v1433
    %v1513 = vpack.c.bf16 %v1440, %v1438
    %1514 = vmatpush.bf16.msra.mxu0 %v1497
    %1515 = vmatpush.bf16.msra.mxu0 %v1496
    %1516 = vmatpush.bf16.msra.mxu0 %v1495
    %1517 = vmatpush.bf16.msra.mxu0 %v1494
    %1518 = vmatpush.bf16.msra.mxu0 %v1493
    %1519 = vmatpush.bf16.msra.mxu0 %v1492
    %1520 = vmatpush.bf16.msra.mxu0 %v1491
    %1521 = vmatpush.bf16.msra.mxu0 %v1490
    %1522 = vmatmul.bf16.gmra.mxu0 %v452
    %v1523 = vpop.f32.mrf.mxu0
    %v1524 = vadd.f32 0.0, %v1523
    %v1525 = vpop.f32.mrf.mxu0
    %v1526 = vadd.f32 0.0, %v1525
    %1527 = vmatmul.bf16.gmra.mxu0 %v455
    %v1528 = vpop.f32.mrf.mxu0
    %v1529 = vadd.f32 0.0, %v1528
    %v1530 = vpop.f32.mrf.mxu0
    %v1531 = vadd.f32 0.0, %v1530
    %1532 = vmatmul.bf16.gmra.mxu0 %v458
    %v1533 = vpop.f32.mrf.mxu0
    %v1534 = vadd.f32 0.0, %v1533
    %v1535 = vpop.f32.mrf.mxu0
    %v1536 = vadd.f32 0.0, %v1535
    %1537 = vmatmul.bf16.gmra.mxu0 %v461
    %v1538 = vpop.f32.mrf.mxu0
    %v1539 = vadd.f32 0.0, %v1538
    %v1540 = vpop.f32.mrf.mxu0
    %v1541 = vadd.f32 0.0, %v1540
    %1542 = vmatmul.bf16.gmra.mxu0 %v464
    %v1543 = vpop.f32.mrf.mxu0
    %v1544 = vadd.f32 0.0, %v1543
    %v1545 = vpop.f32.mrf.mxu0
    %v1546 = vadd.f32 0.0, %v1545
    %1547 = vmatmul.bf16.gmra.mxu0 %v467
    %v1548 = vpop.f32.mrf.mxu0
    %v1549 = vadd.f32 0.0, %v1548
    %v1550 = vpop.f32.mrf.mxu0
    %v1551 = vadd.f32 0.0, %v1550
    %1552 = vmatmul.bf16.gmra.mxu0 %v470
    %v1553 = vpop.f32.mrf.mxu0
    %v1554 = vadd.f32 0.0, %v1553
    %v1555 = vpop.f32.mrf.mxu0
    %v1556 = vadd.f32 0.0, %v1555
    %1557 = vmatmul.bf16.gmra.mxu0 %v473
    %v1558 = vpop.f32.mrf.mxu0
    %v1559 = vadd.f32 0.0, %v1558
    %v1560 = vpop.f32.mrf.mxu0
    %v1561 = vadd.f32 0.0, %v1560
    %1562 = vmatmul.bf16.gmra.mxu0 %v476
    %v1563 = vpop.f32.mrf.mxu0
    %v1564 = vadd.f32 0.0, %v1563
    %v1565 = vpop.f32.mrf.mxu0
    %v1566 = vadd.f32 0.0, %v1565
    %1567 = vmatmul.bf16.gmra.mxu0 %v479
    %v1568 = vpop.f32.mrf.mxu0
    %v1569 = vadd.f32 0.0, %v1568
    %v1570 = vpop.f32.mrf.mxu0
    %v1571 = vadd.f32 0.0, %v1570
    %1572 = vmatmul.bf16.gmra.mxu0 %v482
    %v1573 = vpop.f32.mrf.mxu0
    %v1574 = vadd.f32 0.0, %v1573
    %v1575 = vpop.f32.mrf.mxu0
    %v1576 = vadd.f32 0.0, %v1575
    %1577 = vmatmul.bf16.gmra.mxu0 %v485
    %v1578 = vpop.f32.mrf.mxu0
    %v1579 = vadd.f32 0.0, %v1578
    %v1580 = vpop.f32.mrf.mxu0
    %v1581 = vadd.f32 0.0, %v1580
    %1582 = vmatmul.bf16.gmra.mxu0 %v488
    %v1583 = vpop.f32.mrf.mxu0
    %v1584 = vadd.f32 0.0, %v1583
    %v1585 = vpop.f32.mrf.mxu0
    %v1586 = vadd.f32 0.0, %v1585
    %1587 = vmatmul.bf16.gmra.mxu0 %v491
    %v1588 = vpop.f32.mrf.mxu0
    %v1589 = vadd.f32 0.0, %v1588
    %v1590 = vpop.f32.mrf.mxu0
    %v1591 = vadd.f32 0.0, %v1590
    %1592 = vmatmul.bf16.gmra.mxu0 %v494
    %v1593 = vpop.f32.mrf.mxu0
    %v1594 = vadd.f32 0.0, %v1593
    %v1595 = vpop.f32.mrf.mxu0
    %v1596 = vadd.f32 0.0, %v1595
    %1597 = vmatmul.bf16.gmra.mxu0 %v497
    %v1598 = vpop.f32.mrf.mxu0
    %v1599 = vadd.f32 0.0, %v1598
    %v1600 = vpop.f32.mrf.mxu0
    %v1601 = vadd.f32 0.0, %v1600
    %1602 = vmatmul.bf16.gmra.mxu0 %v500
    %v1603 = vpop.f32.mrf.mxu0
    %v1604 = vadd.f32 0.0, %v1603
    %v1605 = vpop.f32.mrf.mxu0
    %v1606 = vadd.f32 0.0, %v1605
    %1607 = vmatmul.bf16.gmra.mxu0 %v503
    %v1608 = vpop.f32.mrf.mxu0
    %v1609 = vadd.f32 0.0, %v1608
    %v1610 = vpop.f32.mrf.mxu0
    %v1611 = vadd.f32 0.0, %v1610
    %1612 = vmatmul.bf16.gmra.mxu0 %v506
    %v1613 = vpop.f32.mrf.mxu0
    %v1614 = vadd.f32 0.0, %v1613
    %v1615 = vpop.f32.mrf.mxu0
    %v1616 = vadd.f32 0.0, %v1615
    %1617 = vmatmul.bf16.gmra.mxu0 %v509
    %v1618 = vpop.f32.mrf.mxu0
    %v1619 = vadd.f32 0.0, %v1618
    %v1620 = vpop.f32.mrf.mxu0
    %v1621 = vadd.f32 0.0, %v1620
    %1622 = vmatmul.bf16.gmra.mxu0 %v512
    %v1623 = vpop.f32.mrf.mxu0
    %v1624 = vadd.f32 0.0, %v1623
    %v1625 = vpop.f32.mrf.mxu0
    %v1626 = vadd.f32 0.0, %v1625
    %1627 = vmatmul.bf16.gmra.mxu0 %v515
    %v1628 = vpop.f32.mrf.mxu0
    %v1629 = vadd.f32 0.0, %v1628
    %v1630 = vpop.f32.mrf.mxu0
    %v1631 = vadd.f32 0.0, %v1630
    %1632 = vmatmul.bf16.gmra.mxu0 %v518
    %v1633 = vpop.f32.mrf.mxu0
    %v1634 = vadd.f32 0.0, %v1633
    %v1635 = vpop.f32.mrf.mxu0
    %v1636 = vadd.f32 0.0, %v1635
    %1637 = vmatmul.bf16.gmra.mxu0 %v521
    %v1638 = vpop.f32.mrf.mxu0
    %v1639 = vadd.f32 0.0, %v1638
    %v1640 = vpop.f32.mrf.mxu0
    %v1641 = vadd.f32 0.0, %v1640
    %1642 = vdwg.mxu0
    %1643 = vmatpush.bf16.msra.mxu0 %v1505
    %1644 = vmatpush.bf16.msra.mxu0 %v1504
    %1645 = vmatpush.bf16.msra.mxu0 %v1503
    %1646 = vmatpush.bf16.msra.mxu0 %v1502
    %1647 = vmatpush.bf16.msra.mxu0 %v1501
    %1648 = vmatpush.bf16.msra.mxu0 %v1500
    %1649 = vmatpush.bf16.msra.mxu0 %v1499
    %1650 = vmatpush.bf16.msra.mxu0 %v1498
    %1651 = vmatmul.bf16.gmra.mxu0 %v453
    %v1652 = vpop.f32.mrf.mxu0
    %v1653 = vadd.f32 %v1524, %v1652
    %v1654 = vpop.f32.mrf.mxu0
    %v1655 = vadd.f32 %v1526, %v1654
    %1656 = vmatmul.bf16.gmra.mxu0 %v456
    %v1657 = vpop.f32.mrf.mxu0
    %v1658 = vadd.f32 %v1529, %v1657
    %v1659 = vpop.f32.mrf.mxu0
    %v1660 = vadd.f32 %v1531, %v1659
    %1661 = vmatmul.bf16.gmra.mxu0 %v459
    %v1662 = vpop.f32.mrf.mxu0
    %v1663 = vadd.f32 %v1534, %v1662
    %v1664 = vpop.f32.mrf.mxu0
    %v1665 = vadd.f32 %v1536, %v1664
    %1666 = vmatmul.bf16.gmra.mxu0 %v462
    %v1667 = vpop.f32.mrf.mxu0
    %v1668 = vadd.f32 %v1539, %v1667
    %v1669 = vpop.f32.mrf.mxu0
    %v1670 = vadd.f32 %v1541, %v1669
    %1671 = vmatmul.bf16.gmra.mxu0 %v465
    %v1672 = vpop.f32.mrf.mxu0
    %v1673 = vadd.f32 %v1544, %v1672
    %v1674 = vpop.f32.mrf.mxu0
    %v1675 = vadd.f32 %v1546, %v1674
    %1676 = vmatmul.bf16.gmra.mxu0 %v468
    %v1677 = vpop.f32.mrf.mxu0
    %v1678 = vadd.f32 %v1549, %v1677
    %v1679 = vpop.f32.mrf.mxu0
    %v1680 = vadd.f32 %v1551, %v1679
    %1681 = vmatmul.bf16.gmra.mxu0 %v471
    %v1682 = vpop.f32.mrf.mxu0
    %v1683 = vadd.f32 %v1554, %v1682
    %v1684 = vpop.f32.mrf.mxu0
    %v1685 = vadd.f32 %v1556, %v1684
    %1686 = vmatmul.bf16.gmra.mxu0 %v474
    %v1687 = vpop.f32.mrf.mxu0
    %v1688 = vadd.f32 %v1559, %v1687
    %v1689 = vpop.f32.mrf.mxu0
    %v1690 = vadd.f32 %v1561, %v1689
    %1691 = vmatmul.bf16.gmra.mxu0 %v477
    %v1692 = vpop.f32.mrf.mxu0
    %v1693 = vadd.f32 %v1564, %v1692
    %v1694 = vpop.f32.mrf.mxu0
    %v1695 = vadd.f32 %v1566, %v1694
    %1696 = vmatmul.bf16.gmra.mxu0 %v480
    %v1697 = vpop.f32.mrf.mxu0
    %v1698 = vadd.f32 %v1569, %v1697
    %v1699 = vpop.f32.mrf.mxu0
    %v1700 = vadd.f32 %v1571, %v1699
    %1701 = vmatmul.bf16.gmra.mxu0 %v483
    %v1702 = vpop.f32.mrf.mxu0
    %v1703 = vadd.f32 %v1574, %v1702
    %v1704 = vpop.f32.mrf.mxu0
    %v1705 = vadd.f32 %v1576, %v1704
    %1706 = vmatmul.bf16.gmra.mxu0 %v486
    %v1707 = vpop.f32.mrf.mxu0
    %v1708 = vadd.f32 %v1579, %v1707
    %v1709 = vpop.f32.mrf.mxu0
    %v1710 = vadd.f32 %v1581, %v1709
    %1711 = vmatmul.bf16.gmra.mxu0 %v489
    %v1712 = vpop.f32.mrf.mxu0
    %v1713 = vadd.f32 %v1584, %v1712
    %v1714 = vpop.f32.mrf.mxu0
    %v1715 = vadd.f32 %v1586, %v1714
    %1716 = vmatmul.bf16.gmra.mxu0 %v492
    %v1717 = vpop.f32.mrf.mxu0
    %v1718 = vadd.f32 %v1589, %v1717
    %v1719 = vpop.f32.mrf.mxu0
    %v1720 = vadd.f32 %v1591, %v1719
    %1721 = vmatmul.bf16.gmra.mxu0 %v495
    %v1722 = vpop.f32.mrf.mxu0
    %v1723 = vadd.f32 %v1594, %v1722
    %v1724 = vpop.f32.mrf.mxu0
    %v1725 = vadd.f32 %v1596, %v1724
    %1726 = vmatmul.bf16.gmra.mxu0 %v498
    %v1727 = vpop.f32.mrf.mxu0
    %v1728 = vadd.f32 %v1599, %v1727
    %v1729 = vpop.f32.mrf.mxu0
    %v1730 = vadd.f32 %v1601, %v1729
    %1731 = vmatmul.bf16.gmra.mxu0 %v501
    %v1732 = vpop.f32.mrf.mxu0
    %v1733 = vadd.f32 %v1604, %v1732
    %v1734 = vpop.f32.mrf.mxu0
    %v1735 = vadd.f32 %v1606, %v1734
    %1736 = vmatmul.bf16.gmra.mxu0 %v504
    %v1737 = vpop.f32.mrf.mxu0
    %v1738 = vadd.f32 %v1609, %v1737
    %v1739 = vpop.f32.mrf.mxu0
    %v1740 = vadd.f32 %v1611, %v1739
    %1741 = vmatmul.bf16.gmra.mxu0 %v507
    %v1742 = vpop.f32.mrf.mxu0
    %v1743 = vadd.f32 %v1614, %v1742
    %v1744 = vpop.f32.mrf.mxu0
    %v1745 = vadd.f32 %v1616, %v1744
    %1746 = vmatmul.bf16.gmra.mxu0 %v510
    %v1747 = vpop.f32.mrf.mxu0
    %v1748 = vadd.f32 %v1619, %v1747
    %v1749 = vpop.f32.mrf.mxu0
    %v1750 = vadd.f32 %v1621, %v1749
    %1751 = vmatmul.bf16.gmra.mxu0 %v513
    %v1752 = vpop.f32.mrf.mxu0
    %v1753 = vadd.f32 %v1624, %v1752
    %v1754 = vpop.f32.mrf.mxu0
    %v1755 = vadd.f32 %v1626, %v1754
    %1756 = vmatmul.bf16.gmra.mxu0 %v516
    %v1757 = vpop.f32.mrf.mxu0
    %v1758 = vadd.f32 %v1629, %v1757
    %v1759 = vpop.f32.mrf.mxu0
    %v1760 = vadd.f32 %v1631, %v1759
    %1761 = vmatmul.bf16.gmra.mxu0 %v519
    %v1762 = vpop.f32.mrf.mxu0
    %v1763 = vadd.f32 %v1634, %v1762
    %v1764 = vpop.f32.mrf.mxu0
    %v1765 = vadd.f32 %v1636, %v1764
    %1766 = vmatmul.bf16.gmra.mxu0 %v522
    %v1767 = vpop.f32.mrf.mxu0
    %v1768 = vadd.f32 %v1639, %v1767
    %v1769 = vpop.f32.mrf.mxu0
    %v1770 = vadd.f32 %v1641, %v1769
    %1771 = vdwg.mxu0
    %1772 = vmatpush.bf16.msra.mxu0 %v1513
    %1773 = vmatpush.bf16.msra.mxu0 %v1512
    %1774 = vmatpush.bf16.msra.mxu0 %v1511
    %1775 = vmatpush.bf16.msra.mxu0 %v1510
    %1776 = vmatpush.bf16.msra.mxu0 %v1509
    %1777 = vmatpush.bf16.msra.mxu0 %v1508
    %1778 = vmatpush.bf16.msra.mxu0 %v1507
    %1779 = vmatpush.bf16.msra.mxu0 %v1506
    %1780 = vmatmul.bf16.gmra.mxu0 %v454
    %v1781 = vpop.f32.mrf.mxu0
    %v1782 = vadd.f32 %v1653, %v1781
    %v1783 = vpop.f32.mrf.mxu0
    %v1784 = vadd.f32 %v1655, %v1783
    %1785 = vmatmul.bf16.gmra.mxu0 %v457
    %v1786 = vpop.f32.mrf.mxu0
    %v1787 = vadd.f32 %v1658, %v1786
    %v1788 = vpop.f32.mrf.mxu0
    %v1789 = vadd.f32 %v1660, %v1788
    %1790 = vmatmul.bf16.gmra.mxu0 %v460
    %v1791 = vpop.f32.mrf.mxu0
    %v1792 = vadd.f32 %v1663, %v1791
    %v1793 = vpop.f32.mrf.mxu0
    %v1794 = vadd.f32 %v1665, %v1793
    %1795 = vmatmul.bf16.gmra.mxu0 %v463
    %v1796 = vpop.f32.mrf.mxu0
    %v1797 = vadd.f32 %v1668, %v1796
    %v1798 = vpop.f32.mrf.mxu0
    %v1799 = vadd.f32 %v1670, %v1798
    %1800 = vmatmul.bf16.gmra.mxu0 %v466
    %v1801 = vpop.f32.mrf.mxu0
    %v1802 = vadd.f32 %v1673, %v1801
    %v1803 = vpop.f32.mrf.mxu0
    %v1804 = vadd.f32 %v1675, %v1803
    %1805 = vmatmul.bf16.gmra.mxu0 %v469
    %v1806 = vpop.f32.mrf.mxu0
    %v1807 = vadd.f32 %v1678, %v1806
    %v1808 = vpop.f32.mrf.mxu0
    %v1809 = vadd.f32 %v1680, %v1808
    %1810 = vmatmul.bf16.gmra.mxu0 %v472
    %v1811 = vpop.f32.mrf.mxu0
    %v1812 = vadd.f32 %v1683, %v1811
    %v1813 = vpop.f32.mrf.mxu0
    %v1814 = vadd.f32 %v1685, %v1813
    %1815 = vmatmul.bf16.gmra.mxu0 %v475
    %v1816 = vpop.f32.mrf.mxu0
    %v1817 = vadd.f32 %v1688, %v1816
    %v1818 = vpop.f32.mrf.mxu0
    %v1819 = vadd.f32 %v1690, %v1818
    %1820 = vmatmul.bf16.gmra.mxu0 %v478
    %v1821 = vpop.f32.mrf.mxu0
    %v1822 = vadd.f32 %v1693, %v1821
    %v1823 = vpop.f32.mrf.mxu0
    %v1824 = vadd.f32 %v1695, %v1823
    %1825 = vmatmul.bf16.gmra.mxu0 %v481
    %v1826 = vpop.f32.mrf.mxu0
    %v1827 = vadd.f32 %v1698, %v1826
    %v1828 = vpop.f32.mrf.mxu0
    %v1829 = vadd.f32 %v1700, %v1828
    %1830 = vmatmul.bf16.gmra.mxu0 %v484
    %v1831 = vpop.f32.mrf.mxu0
    %v1832 = vadd.f32 %v1703, %v1831
    %v1833 = vpop.f32.mrf.mxu0
    %v1834 = vadd.f32 %v1705, %v1833
    %1835 = vmatmul.bf16.gmra.mxu0 %v487
    %v1836 = vpop.f32.mrf.mxu0
    %v1837 = vadd.f32 %v1708, %v1836
    %v1838 = vpop.f32.mrf.mxu0
    %v1839 = vadd.f32 %v1710, %v1838
    %1840 = vmatmul.bf16.gmra.mxu0 %v490
    %v1841 = vpop.f32.mrf.mxu0
    %v1842 = vadd.f32 %v1713, %v1841
    %v1843 = vpop.f32.mrf.mxu0
    %v1844 = vadd.f32 %v1715, %v1843
    %1845 = vmatmul.bf16.gmra.mxu0 %v493
    %v1846 = vpop.f32.mrf.mxu0
    %v1847 = vadd.f32 %v1718, %v1846
    %v1848 = vpop.f32.mrf.mxu0
    %v1849 = vadd.f32 %v1720, %v1848
    %1850 = vmatmul.bf16.gmra.mxu0 %v496
    %v1851 = vpop.f32.mrf.mxu0
    %v1852 = vadd.f32 %v1723, %v1851
    %v1853 = vpop.f32.mrf.mxu0
    %v1854 = vadd.f32 %v1725, %v1853
    %1855 = vmatmul.bf16.gmra.mxu0 %v499
    %v1856 = vpop.f32.mrf.mxu0
    %v1857 = vadd.f32 %v1728, %v1856
    %v1858 = vpop.f32.mrf.mxu0
    %v1859 = vadd.f32 %v1730, %v1858
    %1860 = vmatmul.bf16.gmra.mxu0 %v502
    %v1861 = vpop.f32.mrf.mxu0
    %v1862 = vadd.f32 %v1733, %v1861
    %v1863 = vpop.f32.mrf.mxu0
    %v1864 = vadd.f32 %v1735, %v1863
    %1865 = vmatmul.bf16.gmra.mxu0 %v505
    %v1866 = vpop.f32.mrf.mxu0
    %v1867 = vadd.f32 %v1738, %v1866
    %v1868 = vpop.f32.mrf.mxu0
    %v1869 = vadd.f32 %v1740, %v1868
    %1870 = vmatmul.bf16.gmra.mxu0 %v508
    %v1871 = vpop.f32.mrf.mxu0
    %v1872 = vadd.f32 %v1743, %v1871
    %v1873 = vpop.f32.mrf.mxu0
    %v1874 = vadd.f32 %v1745, %v1873
    %1875 = vmatmul.bf16.gmra.mxu0 %v511
    %v1876 = vpop.f32.mrf.mxu0
    %v1877 = vadd.f32 %v1748, %v1876
    %v1878 = vpop.f32.mrf.mxu0
    %v1879 = vadd.f32 %v1750, %v1878
    %1880 = vmatmul.bf16.gmra.mxu0 %v514
    %v1881 = vpop.f32.mrf.mxu0
    %v1882 = vadd.f32 %v1753, %v1881
    %v1883 = vpop.f32.mrf.mxu0
    %v1884 = vadd.f32 %v1755, %v1883
    %1885 = vmatmul.bf16.gmra.mxu0 %v517
    %v1886 = vpop.f32.mrf.mxu0
    %v1887 = vadd.f32 %v1758, %v1886
    %v1888 = vpop.f32.mrf.mxu0
    %v1889 = vadd.f32 %v1760, %v1888
    %1890 = vmatmul.bf16.gmra.mxu0 %v520
    %v1891 = vpop.f32.mrf.mxu0
    %v1892 = vadd.f32 %v1763, %v1891
    %v1893 = vpop.f32.mrf.mxu0
    %v1894 = vadd.f32 %v1765, %v1893
    %1895 = vmatmul.bf16.gmra.mxu0 %v523
    %v1896 = vpop.f32.mrf.mxu0
    %v1897 = vadd.f32 %v1768, %v1896
    %v1898 = vpop.f32.mrf.mxu0
    %v1899 = vadd.f32 %v1770, %v1898
    %1900 = vdwg.mxu0
    %v1901 = vadd.f32 %v1442, %v1782
    %v1902 = vadd.f32 %v1443, %v1784
    %v1903 = vadd.f32 %v1444, %v1787
    %v1904 = vadd.f32 %v1445, %v1789
    %v1905 = vadd.f32 %v1446, %v1792
    %v1906 = vadd.f32 %v1447, %v1794
    %v1907 = vadd.f32 %v1448, %v1797
    %v1908 = vadd.f32 %v1449, %v1799
    %v1909 = vadd.f32 %v1450, %v1802
    %v1910 = vadd.f32 %v1451, %v1804
    %v1911 = vadd.f32 %v1452, %v1807
    %v1912 = vadd.f32 %v1453, %v1809
    %v1913 = vadd.f32 %v1454, %v1812
    %v1914 = vadd.f32 %v1455, %v1814
    %v1915 = vadd.f32 %v1456, %v1817
    %v1916 = vadd.f32 %v1457, %v1819
    %v1917 = vadd.f32 %v1458, %v1822
    %v1918 = vadd.f32 %v1459, %v1824
    %v1919 = vadd.f32 %v1460, %v1827
    %v1920 = vadd.f32 %v1461, %v1829
    %v1921 = vadd.f32 %v1462, %v1832
    %v1922 = vadd.f32 %v1463, %v1834
    %v1923 = vadd.f32 %v1464, %v1837
    %v1924 = vadd.f32 %v1465, %v1839
    %v1925 = vadd.f32 %v1466, %v1842
    %v1926 = vadd.f32 %v1467, %v1844
    %v1927 = vadd.f32 %v1468, %v1847
    %v1928 = vadd.f32 %v1469, %v1849
    %v1929 = vadd.f32 %v1470, %v1852
    %v1930 = vadd.f32 %v1471, %v1854
    %v1931 = vadd.f32 %v1472, %v1857
    %v1932 = vadd.f32 %v1473, %v1859
    %v1933 = vadd.f32 %v1474, %v1862
    %v1934 = vadd.f32 %v1475, %v1864
    %v1935 = vadd.f32 %v1476, %v1867
    %v1936 = vadd.f32 %v1477, %v1869
    %v1937 = vadd.f32 %v1478, %v1872
    %v1938 = vadd.f32 %v1479, %v1874
    %v1939 = vadd.f32 %v1480, %v1877
    %v1940 = vadd.f32 %v1481, %v1879
    %v1941 = vadd.f32 %v1482, %v1882
    %v1942 = vadd.f32 %v1483, %v1884
    %v1943 = vadd.f32 %v1484, %v1887
    %v1944 = vadd.f32 %v1485, %v1889
    %v1945 = vadd.f32 %v1486, %v1892
    %v1946 = vadd.f32 %v1487, %v1894
    %v1947 = vadd.f32 %v1488, %v1897
    %v1948 = vadd.f32 %v1489, %v1899
    %v1949 = vmul.f32 %v1901, 0.25
    %v1950 = vmul.f32 %v1902, 0.25
    %v1951 = vmul.f32 %v1903, 0.25
    %v1952 = vmul.f32 %v1904, 0.25
    %v1953 = vmul.f32 %v1905, 0.25
    %v1954 = vmul.f32 %v1906, 0.25
    %v1955 = vmul.f32 %v1907, 0.25
    %v1956 = vmul.f32 %v1908, 0.25
    %v1957 = vmul.f32 %v1909, 0.25
    %v1958 = vmul.f32 %v1910, 0.25
    %v1959 = vmul.f32 %v1911, 0.25
    %v1960 = vmul.f32 %v1912, 0.25
    %v1961 = vmul.f32 %v1913, 0.25
    %v1962 = vmul.f32 %v1914, 0.25
    %v1963 = vmul.f32 %v1915, 0.25
    %v1964 = vmul.f32 %v1916, 0.25
    %v1965 = vmul.f32 %v1917, 0.25
    %v1966 = vmul.f32 %v1918, 0.25
    %v1967 = vmul.f32 %v1919, 0.25
    %v1968 = vmul.f32 %v1920, 0.25
    %v1969 = vmul.f32 %v1921, 0.25
    %v1970 = vmul.f32 %v1922, 0.25
    %v1971 = vmul.f32 %v1923, 0.25
    %v1972 = vmul.f32 %v1924, 0.25
    %v1973 = vmul.f32 %v1925, 0.25
    %v1974 = vmul.f32 %v1926, 0.25
    %v1975 = vmul.f32 %v1927, 0.25
    %v1976 = vmul.f32 %v1928, 0.25
    %v1977 = vmul.f32 %v1929, 0.25
    %v1978 = vmul.f32 %v1930, 0.25
    %v1979 = vmul.f32 %v1931, 0.25
    %v1980 = vmul.f32 %v1932, 0.25
    %v1981 = vmul.f32 %v1933, 0.25
    %v1982 = vmul.f32 %v1934, 0.25
    %v1983 = vmul.f32 %v1935, 0.25
    %v1984 = vmul.f32 %v1936, 0.25
    %v1985 = vmul.f32 %v1937, 0.25
    %v1986 = vmul.f32 %v1938, 0.25
    %v1987 = vmul.f32 %v1939, 0.25
    %v1988 = vmul.f32 %v1940, 0.25
    %v1989 = vmul.f32 %v1941, 0.25
    %v1990 = vmul.f32 %v1942, 0.25
    %v1991 = vmul.f32 %v1943, 0.25
    %v1992 = vmul.f32 %v1944, 0.25
    %v1993 = vmul.f32 %v1945, 0.25
    %v1994 = vmul.f32 %v1946, 0.25
    %v1995 = vmul.f32 %v1947, 0.25
    %v1996 = vmul.f32 %v1948, 0.25
    %1997 = vst [vmem:[#allocation7] sm:$0xff] %v1949
    %1998 = vst [vmem:[#allocation7 + $0x8] sm:$0xff] %v1950
    %1999 = vst [vmem:[#allocation7 + $0x10] sm:$0xff] %v1951
    %2000 = vst [vmem:[#allocation7 + $0x18] sm:$0xff] %v1952
    %2001 = vst [vmem:[#allocation7 + $0x20] sm:$0xff] %v1953
    %2002 = vst [vmem:[#allocation7 + $0x28] sm:$0xff] %v1954
    %2003 = vst [vmem:[#allocation7 + $0x30] sm:$0xff] %v1955
    %2004 = vst [vmem:[#allocation7 + $0x38] sm:$0xff] %v1956
    %2005 = vst [vmem:[#allocation7 + $0x40] sm:$0xff] %v1957
    %2006 = vst [vmem:[#allocation7 + $0x48] sm:$0xff] %v1958
    %2007 = vst [vmem:[#allocation7 + $0x50] sm:$0xff] %v1959
    %2008 = vst [vmem:[#allocation7 + $0x58] sm:$0xff] %v1960
    %2009 = vst [vmem:[#allocation7 + $0x60] sm:$0xff] %v1961
    %2010 = vst [vmem:[#allocation7 + $0x68] sm:$0xff] %v1962
    %2011 = vst [vmem:[#allocation7 + $0x70] sm:$0xff] %v1963
    %2012 = vst [vmem:[#allocation7 + $0x78] sm:$0xff] %v1964
    %2013 = vst [vmem:[#allocation7 + $0x80] sm:$0xff] %v1965
    %2014 = vst [vmem:[#allocation7 + $0x88] sm:$0xff] %v1966
    %2015 = vst [vmem:[#allocation7 + $0x90] sm:$0xff] %v1967
    %2016 = vst [vmem:[#allocation7 + $0x98] sm:$0xff] %v1968
    %2017 = vst [vmem:[#allocation7 + $0xa0] sm:$0xff] %v1969
    %2018 = vst [vmem:[#allocation7 + $0xa8] sm:$0xff] %v1970
    %2019 = vst [vmem:[#allocation7 + $0xb0] sm:$0xff] %v1971
    %2020 = vst [vmem:[#allocation7 + $0xb8] sm:$0xff] %v1972
    %2021 = vst [vmem:[#allocation7 + $0xc0] sm:$0xff] %v1973
    %2022 = vst [vmem:[#allocation7 + $0xc8] sm:$0xff] %v1974
    %2023 = vst [vmem:[#allocation7 + $0xd0] sm:$0xff] %v1975
    %2024 = vst [vmem:[#allocation7 + $0xd8] sm:$0xff] %v1976
    %2025 = vst [vmem:[#allocation7 + $0xe0] sm:$0xff] %v1977
    %2026 = vst [vmem:[#allocation7 + $0xe8] sm:$0xff] %v1978
    %2027 = vst [vmem:[#allocation7 + $0xf0] sm:$0xff] %v1979
    %2028 = vst [vmem:[#allocation7 + $0xf8] sm:$0xff] %v1980
    %2029 = vst [vmem:[#allocation7 + $0x100] sm:$0xff] %v1981
    %2030 = vst [vmem:[#allocation7 + $0x108] sm:$0xff] %v1982
    %2031 = vst [vmem:[#allocation7 + $0x110] sm:$0xff] %v1983
    %2032 = vst [vmem:[#allocation7 + $0x118] sm:$0xff] %v1984
    %2033 = vst [vmem:[#allocation7 + $0x120] sm:$0xff] %v1985
    %2034 = vst [vmem:[#allocation7 + $0x128] sm:$0xff] %v1986
    %2035 = vst [vmem:[#allocation7 + $0x130] sm:$0xff] %v1987
    %2036 = vst [vmem:[#allocation7 + $0x138] sm:$0xff] %v1988
    %2037 = vst [vmem:[#allocation7 + $0x140] sm:$0xff] %v1989
    %2038 = vst [vmem:[#allocation7 + $0x148] sm:$0xff] %v1990
    %2039 = vst [vmem:[#allocation7 + $0x150] sm:$0xff] %v1991
    %2040 = vst [vmem:[#allocation7 + $0x158] sm:$0xff] %v1992
    %2041 = vst [vmem:[#allocation7 + $0x160] sm:$0xff] %v1993
    %2042 = vst [vmem:[#allocation7 + $0x168] sm:$0xff] %v1994
    %2043 = vst [vmem:[#allocation7 + $0x170] sm:$0xff] %v1995
    %2044 = vst [vmem:[#allocation7 + $0x178] sm:$0xff] %v1996
    // Predicated region
    $region18: #{tpu_custom_call.1} parent=1 // pred_check
      _
    $region19: #{tpu_custom_call.1} parent=1 // pred_check_branch
      %2046 = sbr.rel (0) target = $region21
    $region20: #{tpu_custom_call.1} parent=1 // pred_region
      %2048 = vsyncadd [#allocation4], 0
      %s2049 = sshll.u32 [#allocation7], 4
      %s2050 = int_to_ptr.vmem [resolvable:$true] %s2049
      %s2051 = sshll.u32 %s2, 4
      %s2052 = int_to_ptr.hbm [resolvable:$true] %s2051
      %2057 = dma.vmem_to_hbm [thread:$0]  %s2050, 6144, %s2052, [#allocation4], 128, 128, 8
    $region21: #{tpu_custom_call.1} parent=1 // pred_fallthru
      _
    // Predicated region
    $region22: #{tpu_custom_call.1} parent=1 // pred_check
      _
    $region23: #{tpu_custom_call.1} parent=1 // pred_check_branch
      %2059 = sbr.rel (0) target = $region25
    $region24: #{tpu_custom_call.1} parent=1 // pred_region
      %2061 = dma.done [#allocation4], 6144
    $region25: #{tpu_custom_call.1} parent=1 // pred_fallthru
      _
    %2062 = vsyncpa [#allocation3], 1
    %2063 = vsyncpa [#allocation6], 1
    %2064 = vsyncpa [#allocation4], 1

</llo_original>
